<compile_context>
chip_gen: v7x
topology: tpu7x:2x2x1
jax: 0.10.0
libtpu: 0.0.40
codegen_flags: <defaults>
</compile_context>

<pallas_src>
import functools

import jax
import jax.numpy as jnp
from jax.experimental import pallas as pl
from jax.experimental.pallas import tpu as pltpu


# ----------------------------------------------------------------------------
# Single fused kernel: encoder GRU -> attention -> decoder GRU step -> fc -> loss
# ----------------------------------------------------------------------------
def fused_kernel(x_flat_ref, xemb_ref, dst_ref,
                 e_wih_ref, e_whh_ref, w1_ref, w2_ref,
                 d_wihe_ref, d_wihh_ref, fc_ref, bias_ref,
                 loss_ref, *, real_b):
    f32 = jnp.float32
    bf16 = jnp.bfloat16

    SBP = x_flat_ref.shape[0]
    BP = xemb_ref.shape[0]            # sublane-padded batch (multiple of 8)
    S = SBP // BP
    H = e_whh_ref.shape[0]
    H3 = 3 * H
    V = fc_ref.shape[1]
    T = dst_ref.shape[1]

    # ---- unpack the packed bias / small-vector slab (one DMA instead of nine) ----
    bias = bias_ref[...]
    e_bih = bias[0:1, 0:H3]
    e_bhh = bias[1:2, 0:H3]
    d_bih = bias[2:3, 0:H3]
    d_bhh = bias[3:4, 0:H3]
    b1    = bias[4:5, 0:H]
    b2    = bias[5:6, 0:H]
    v_row = bias[6:7, 0:H]
    fcb   = bias[7:8, 0:V]

    # ---- encoder GRU: hoisted input projection (one bf16 MXU matmul for all steps) ----
    gi_all = jnp.dot(x_flat_ref[...], e_wih_ref[...],
                     preferred_element_type=f32) + e_bih            # (S*BP, 3H) f32
    e_whh = e_whh_ref[...]                                          # (H, 3H) bf16

    h = None
    h_list = []
    for s in range(S):                               # fully unrolled, whole-tile slices
        gi = gi_all[s * BP:(s + 1) * BP, :]          # (BP, 3H)
        if h is None:
            gh = e_bhh                               # h0 == 0 -> recurrent matmul vanishes
        else:
            gh = jnp.dot(h.astype(bf16), e_whh, preferred_element_type=f32) + e_bhh
        r = jax.nn.sigmoid(gi[:, 0:H] + gh[:, 0:H])
        z = jax.nn.sigmoid(gi[:, H:2 * H] + gh[:, H:2 * H])
        n = jnp.tanh(gi[:, 2 * H:H3] + r * gh[:, 2 * H:H3])
        h = (1.0 - z) * n if h is None else (1.0 - z) * n + z * h
        h_list.append(h)                             # h: (BP, H) f32

    # ---- additive attention, kept in (S, BP, H) layout (no sublane/lane concats) ----
    enc_3d = jnp.stack(h_list, axis=0)                               # (S, BP, H)
    enc_flat = enc_3d.reshape(SBP, H)                                # tile-preserving view
    w1o = jnp.dot(enc_flat.astype(bf16), w1_ref[...],
                  preferred_element_type=f32).reshape(S, BP, H) + b1
    w2o = jnp.dot(h.astype(bf16), w2_ref[...],
                  preferred_element_type=f32) + b2                   # (BP, H)
    feat = jnp.tanh(w1o + w2o[None, :, :])                           # broadcast over S
    # V(.) score as a VPU/XLU lane reduction; the V bias is constant over the softmax
    # axis (S) so it cancels exactly and is dropped.
    score = jnp.sum(feat * v_row, axis=-1, keepdims=True)            # (S, BP, 1)
    m = jnp.max(score, axis=0, keepdims=True)
    e = jnp.exp(score - m)
    attn = e * pl.reciprocal(jnp.sum(e, axis=0, keepdims=True), approx=True)  # (S, BP, 1)
    context = jnp.sum(attn * enc_3d, axis=0)                          # (BP, H)

    # ---- decoder GRU single step (h0 == 0), Wih pre-split to avoid the input concat ----
    gi_d = (jnp.dot(xemb_ref[...], d_wihe_ref[...], preferred_element_type=f32)
            + jnp.dot(context.astype(bf16), d_wihh_ref[...], preferred_element_type=f32)
            + d_bih)                                                  # (BP, 3H)
    r = jax.nn.sigmoid(gi_d[:, 0:H] + d_bhh[:, 0:H])
    z = jax.nn.sigmoid(gi_d[:, H:2 * H] + d_bhh[:, H:2 * H])
    n = jnp.tanh(gi_d[:, 2 * H:H3] + r * d_bhh[:, 2 * H:H3])
    h1 = (1.0 - z) * n                                                # + z * 0
    logits = jnp.dot(h1.astype(bf16), fc_ref[...],
                     preferred_element_type=f32) + fcb                # (BP, V)

    # ---- masked CE loss, all target steps folded into one reduction (exact LSE) ----
    mlog = jnp.max(logits, axis=-1, keepdims=True)
    lse = jnp.log(jnp.sum(jnp.exp(logits - mlog), axis=-1, keepdims=True)) + mlog
    logp = logits - lse                                               # (BP, V)

    dst = dst_ref[...]                                                # (BP, T) i32, pad rows == 0
    cnt = jnp.sum((dst != 0).astype(f32), axis=0, keepdims=True)      # (1, T) real rows only
    vid = jax.lax.broadcasted_iota(jnp.int32, (BP, V), 1)
    w = jnp.zeros((BP, V), f32)
    for t in range(1, T):                                             # cheap compare+select+add
        w = w + jnp.where(vid == dst[:, t:t + 1], cnt[:, t:t + 1], 0.0)
    row_id = jax.lax.broadcasted_iota(jnp.int32, (BP, V), 0)
    w = jnp.where(row_id < real_b, w, 0.0)                            # drop padded batch rows
    # sum_t CE_mean_t * cnt_t  ==  -(1/B) * sum_{b,v} logp[b,v] * W[b,v]
    loss_ref[0, 0] = -jnp.sum(logp * w) / jnp.float32(real_b)


def encoder_decoder_loss(src, dst, dec_input, params):
    (enc_emb, enc_wih, enc_whh, enc_bih, enc_bhh,
     dec_emb, dec_wih, dec_whh, dec_bih, dec_bhh,
     w1_w, w1_b, w2_w, w2_b, v_w, v_b, fc_w, fc_b) = params
    del dec_whh        # decoder h0 == 0 -> recurrent weights never contribute
    del v_b            # constant over softmax axis -> cancels exactly

    B, S = src.shape
    T = dst.shape[1]
    E = enc_emb.shape[1]
    H = enc_whh.shape[1]
    V = fc_w.shape[0]
    BP = 8 * ((B + 7) // 8)        # pad batch to a full sublane tile
    bf = jnp.bfloat16

    # glue: embedding gathers, padding and weight layout prep in plain JAX (tiny, fused by XLA)
    src_t = jnp.pad(jnp.transpose(src), ((0, 0), (0, BP - B)))                 # (S, BP)
    x_flat = jnp.take(enc_emb, jnp.reshape(src_t, (-1,)), axis=0).astype(bf)   # (S*BP, E)
    dec_in = jnp.pad(dec_input, (0, BP - B))
    xemb = jnp.take(dec_emb, dec_in, axis=0).astype(bf)                        # (BP, E)
    dst_p = jnp.pad(dst, ((0, BP - B), (0, 0)))                                # (BP, T)

    # pack the nine tiny bias/vector operands into one (8, max(3H, V)) f32 slab (one DMA).
    width = max(3 * H, H, V)

    def row(vec):
        vec = vec.astype(jnp.float32)
        return jnp.pad(vec, (0, width - vec.shape[0]))[None, :]

    bias_slab = jnp.concatenate(
        [row(enc_bih), row(enc_bhh), row(dec_bih), row(dec_bhh),
         row(w1_b), row(w2_b), row(v_w[0]), row(fc_b)], axis=0)                # (8, width)

    kernel = functools.partial(fused_kernel, real_b=B)
    out = pl.pallas_call(
        kernel,
        out_shape=jax.ShapeDtypeStruct((1, 1), jnp.float32),
        in_specs=[pl.BlockSpec(memory_space=pltpu.MemorySpace.VMEM)] * 11,
        out_specs=pl.BlockSpec(memory_space=pltpu.MemorySpace.SMEM),
    )(x_flat, xemb, dst_p,
      enc_wih.T.astype(bf), enc_whh.T.astype(bf),
      w1_w.T.astype(bf), w2_w.T.astype(bf),
      dec_wih[:, :E].T.astype(bf), dec_wih[:, E:].T.astype(bf),
      fc_w.T.astype(bf), bias_slab)
    return out[0, 0]


# ----------------------------------------------------------------------------
# Pure-JAX reference (same math, f32) for a sanity check.
# ----------------------------------------------------------------------------
def ref_loss_fn(src, dst, start_token, params):
    (enc_emb, enc_wih, enc_whh, enc_bih, enc_bhh,
     dec_emb, dec_wih, dec_whh, dec_bih, dec_bhh,
     w1_w, w1_b, w2_w, w2_b, v_w, v_b, fc_w, fc_b) = params
    B = src.shape[0]

    def gru_seq(x, wih, whh, bih, bhh):
        H = whh.shape[1]
        h = jnp.zeros((x.shape[0], H), jnp.float32)
        outs = []
        for t in range(x.shape[1]):
            gi = x[:, t] @ wih.T + bih
            gh = h @ whh.T + bhh
            r = jax.nn.sigmoid(gi[:, :H] + gh[:, :H])
            z = jax.nn.sigmoid(gi[:, H:2 * H] + gh[:, H:2 * H])
            n = jnp.tanh(gi[:, 2 * H:] + r * gh[:, 2 * H:])
            h = (1 - z) * n + z * h
            outs.append(h)
        return jnp.stack(outs, axis=1), h

    enc_o, enc_h = gru_seq(jnp.take(enc_emb, src, axis=0),
                           enc_wih, enc_whh, enc_bih, enc_bhh)
    w1o = enc_o @ w1_w.T + w1_b
    w2o = enc_h @ w2_w.T + w2_b
    score = jnp.tanh(w1o + w2o[:, None, :]) @ v_w.T + v_b          # (B, S, 1)
    attn = jax.nn.softmax(score, axis=1)
    ctx = jnp.sum(attn * enc_o, axis=1)                            # (B, H)
    xemb = jnp.take(dec_emb, jnp.full((B,), start_token, jnp.int32), axis=0)
    xin = jnp.concatenate([xemb, ctx], axis=-1)[:, None, :]
    dec_o, _ = gru_seq(xin, dec_wih, dec_whh, dec_bih, dec_bhh)
    out = dec_o[:, 0] @ fc_w.T + fc_b
    logp = jax.nn.log_softmax(out, axis=-1)
    total = jnp.float32(0.0)
    for t in range(1, dst.shape[1]):
        tok = dst[:, t]
        ce = -jnp.mean(logp[jnp.arange(B), tok])
        cnt = jnp.sum((tok != 0).astype(jnp.float32))
        total = total + ce * cnt
    return total


if __name__ == "__main__":
    B, S_SRC, T_DST = 4, 8, 8
    E, H = 16, 32
    SRC_VOCAB, DST_VOCAB = 32, 32
    START_TOKEN = 1

    key = jax.random.PRNGKey(0)
    ks = jax.random.split(key, 20)

    def init(k, shape, scale=0.1):
        return (scale * jax.random.normal(k, shape)).astype(jnp.float32)

    enc_emb = init(ks[0], (SRC_VOCAB, E))
    enc_wih = init(ks[1], (3 * H, E))
    enc_whh = init(ks[2], (3 * H, H))
    enc_bih = init(ks[3], (3 * H,))
    enc_bhh = init(ks[4], (3 * H,))
    dec_emb = init(ks[5], (DST_VOCAB, E))
    dec_wih = init(ks[6], (3 * H, E + H))
    dec_whh = init(ks[7], (3 * H, H))      # unused at runtime (decoder h0 == 0)
    dec_bih = init(ks[8], (3 * H,))
    dec_bhh = init(ks[9], (3 * H,))
    w1_w = init(ks[10], (H, H)); w1_b = init(ks[11], (H,))
    w2_w = init(ks[12], (H, H)); w2_b = init(ks[13], (H,))
    v_w = init(ks[14], (1, H));  v_b = init(ks[15], (1,))
    fc_w = init(ks[16], (DST_VOCAB, H)); fc_b = init(ks[17], (DST_VOCAB,))

    src = jax.random.randint(ks[18], (B, S_SRC), 0, SRC_VOCAB, dtype=jnp.int32)
    dst = jax.random.randint(ks[19], (B, T_DST), 0, DST_VOCAB, dtype=jnp.int32)

    params = (enc_emb, enc_wih, enc_whh, enc_bih, enc_bhh,
              dec_emb, dec_wih, dec_whh, dec_bih, dec_bhh,
              w1_w, w1_b, w2_w, w2_b, v_w, v_b, fc_w, fc_b)

    dec_input = jnp.full((B,), START_TOKEN, dtype=jnp.int32)

    loss_fn = jax.jit(encoder_decoder_loss)
    loss = loss_fn(src, dst, dec_input, params)
    loss = jax.block_until_ready(loss)

    with jax.default_matmul_precision("highest"):
        ref = ref_loss_fn(src, dst, START_TOKEN, params)
    ref = jax.block_until_ready(ref)

    assert bool(jnp.isfinite(loss)), "loss is not finite"
    assert bool(jnp.allclose(loss, ref, rtol=1e-2, atol=1e-2)), \
        f"mismatch: pallas={float(loss)} ref={float(ref)}"
    print("KERNEL_OK")
</pallas_src>

<mosaic_0001>
module attributes {stable_mosaic.version = 11 : i64} {
  func.func @fused_kernel(%arg0: memref<64x16xbf16, #tpu.memory_space<vmem>>, %arg1: memref<8x16xbf16, #tpu.memory_space<vmem>>, %arg2: memref<8x8xi32, #tpu.memory_space<vmem>>, %arg3: memref<16x96xbf16, #tpu.memory_space<vmem>>, %arg4: memref<32x96xbf16, #tpu.memory_space<vmem>>, %arg5: memref<32x32xbf16, #tpu.memory_space<vmem>>, %arg6: memref<32x32xbf16, #tpu.memory_space<vmem>>, %arg7: memref<16x96xbf16, #tpu.memory_space<vmem>>, %arg8: memref<32x96xbf16, #tpu.memory_space<vmem>>, %arg9: memref<32x32xbf16, #tpu.memory_space<vmem>>, %arg10: memref<8x96xf32, #tpu.memory_space<vmem>>, %arg11: memref<1x1xf32, #tpu.memory_space<smem>>) attributes {dimension_semantics = [], scalar_prefetch = 0 : i64, scratch_operands = 0 : i64, tpu.core_type = #tpu.core_type<tc>} {
    %c0 = arith.constant 0 : index
    %c0_0 = arith.constant 0 : index
    %0 = vector.load %arg10[%c0, %c0_0] : memref<8x96xf32, #tpu.memory_space<vmem>>, vector<8x96xf32>
    %1 = vector.extract_strided_slice %0 {offsets = [0, 0], sizes = [1, 96], strides = [1, 1]} : vector<8x96xf32> to vector<1x96xf32>
    %2 = vector.extract_strided_slice %0 {offsets = [1, 0], sizes = [1, 96], strides = [1, 1]} : vector<8x96xf32> to vector<1x96xf32>
    %3 = vector.extract_strided_slice %0 {offsets = [2, 0], sizes = [1, 96], strides = [1, 1]} : vector<8x96xf32> to vector<1x96xf32>
    %4 = vector.extract_strided_slice %0 {offsets = [3, 0], sizes = [1, 96], strides = [1, 1]} : vector<8x96xf32> to vector<1x96xf32>
    %5 = vector.extract_strided_slice %0 {offsets = [4, 0], sizes = [1, 32], strides = [1, 1]} : vector<8x96xf32> to vector<1x32xf32>
    %6 = vector.extract_strided_slice %0 {offsets = [5, 0], sizes = [1, 32], strides = [1, 1]} : vector<8x96xf32> to vector<1x32xf32>
    %7 = vector.extract_strided_slice %0 {offsets = [6, 0], sizes = [1, 32], strides = [1, 1]} : vector<8x96xf32> to vector<1x32xf32>
    %8 = vector.extract_strided_slice %0 {offsets = [7, 0], sizes = [1, 32], strides = [1, 1]} : vector<8x96xf32> to vector<1x32xf32>
    %c0_1 = arith.constant 0 : index
    %c0_2 = arith.constant 0 : index
    %9 = vector.load %arg0[%c0_1, %c0_2] : memref<64x16xbf16, #tpu.memory_space<vmem>>, vector<64x16xbf16>
    %c0_3 = arith.constant 0 : index
    %c0_4 = arith.constant 0 : index
    %10 = vector.load %arg3[%c0_3, %c0_4] : memref<16x96xbf16, #tpu.memory_space<vmem>>, vector<16x96xbf16>
    %cst = arith.constant dense<0.000000e+00> : vector<64x96xf32>
    %11 = tpu.matmul %9, %10, %cst {dimension_numbers = #tpu.dot_dimension_numbers<[1], [0], [0], [1], [0, 0, 1, 1], [], []>} : vector<64x16xbf16>, vector<16x96xbf16>, vector<64x96xf32> -> vector<64x96xf32>
    %12 = vector.broadcast %1 : vector<1x96xf32> to vector<64x96xf32>
    %13 = arith.addf %11, %12 : vector<64x96xf32>
    %c0_5 = arith.constant 0 : index
    %c0_6 = arith.constant 0 : index
    %14 = vector.load %arg4[%c0_5, %c0_6] : memref<32x96xbf16, #tpu.memory_space<vmem>>, vector<32x96xbf16>
    %15 = vector.extract_strided_slice %13 {offsets = [0, 0], sizes = [8, 96], strides = [1, 1]} : vector<64x96xf32> to vector<8x96xf32>
    %16 = vector.extract_strided_slice %15 {offsets = [0, 0], sizes = [8, 32], strides = [1, 1]} : vector<8x96xf32> to vector<8x32xf32>
    %17 = vector.extract_strided_slice %2 {offsets = [0, 0], sizes = [1, 32], strides = [1, 1]} : vector<1x96xf32> to vector<1x32xf32>
    %18 = vector.broadcast %17 : vector<1x32xf32> to vector<8x32xf32>
    %19 = arith.addf %16, %18 : vector<8x32xf32>
    %20 = arith.negf %19 : vector<8x32xf32>
    %21 = math.exp %20 : vector<8x32xf32>
    %cst_7 = arith.constant 1.000000e+00 : f32
    %22 = vector.broadcast %cst_7 : f32 to vector<8x32xf32>
    %23 = arith.addf %22, %21 : vector<8x32xf32>
    %24 = arith.divf %22, %23 : vector<8x32xf32>
    %25 = vector.extract_strided_slice %15 {offsets = [0, 32], sizes = [8, 32], strides = [1, 1]} : vector<8x96xf32> to vector<8x32xf32>
    %26 = vector.extract_strided_slice %2 {offsets = [0, 32], sizes = [1, 32], strides = [1, 1]} : vector<1x96xf32> to vector<1x32xf32>
    %27 = vector.broadcast %26 : vector<1x32xf32> to vector<8x32xf32>
    %28 = arith.addf %25, %27 : vector<8x32xf32>
    %29 = arith.negf %28 : vector<8x32xf32>
    %30 = math.exp %29 : vector<8x32xf32>
    %cst_8 = arith.constant 1.000000e+00 : f32
    %31 = vector.broadcast %cst_8 : f32 to vector<8x32xf32>
    %32 = arith.addf %31, %30 : vector<8x32xf32>
    %33 = arith.divf %31, %32 : vector<8x32xf32>
    %34 = vector.extract_strided_slice %15 {offsets = [0, 64], sizes = [8, 32], strides = [1, 1]} : vector<8x96xf32> to vector<8x32xf32>
    %35 = vector.extract_strided_slice %2 {offsets = [0, 64], sizes = [1, 32], strides = [1, 1]} : vector<1x96xf32> to vector<1x32xf32>
    %36 = vector.broadcast %35 : vector<1x32xf32> to vector<8x32xf32>
    %37 = arith.mulf %24, %36 : vector<8x32xf32>
    %38 = arith.addf %34, %37 : vector<8x32xf32>
    %39 = math.tanh %38 : vector<8x32xf32>
    %cst_9 = arith.constant 1.000000e+00 : f32
    %40 = vector.broadcast %cst_9 : f32 to vector<8x32xf32>
    %41 = arith.subf %40, %33 : vector<8x32xf32>
    %42 = arith.mulf %41, %39 : vector<8x32xf32>
    %43 = vector.extract_strided_slice %13 {offsets = [8, 0], sizes = [8, 96], strides = [1, 1]} : vector<64x96xf32> to vector<8x96xf32>
    %44 = arith.truncf %42 : vector<8x32xf32> to vector<8x32xbf16>
    %cst_10 = arith.constant dense<0.000000e+00> : vector<8x96xf32>
    %45 = tpu.matmul %44, %14, %cst_10 {dimension_numbers = #tpu.dot_dimension_numbers<[1], [0], [0], [1], [0, 0, 1, 1], [], []>} : vector<8x32xbf16>, vector<32x96xbf16>, vector<8x96xf32> -> vector<8x96xf32>
    %46 = vector.broadcast %2 : vector<1x96xf32> to vector<8x96xf32>
    %47 = arith.addf %45, %46 : vector<8x96xf32>
    %48 = vector.extract_strided_slice %43 {offsets = [0, 0], sizes = [8, 32], strides = [1, 1]} : vector<8x96xf32> to vector<8x32xf32>
    %49 = vector.extract_strided_slice %47 {offsets = [0, 0], sizes = [8, 32], strides = [1, 1]} : vector<8x96xf32> to vector<8x32xf32>
    %50 = arith.addf %48, %49 : vector<8x32xf32>
    %51 = arith.negf %50 : vector<8x32xf32>
    %52 = math.exp %51 : vector<8x32xf32>
    %cst_11 = arith.constant 1.000000e+00 : f32
    %53 = vector.broadcast %cst_11 : f32 to vector<8x32xf32>
    %54 = arith.addf %53, %52 : vector<8x32xf32>
    %55 = arith.divf %53, %54 : vector<8x32xf32>
    %56 = vector.extract_strided_slice %43 {offsets = [0, 32], sizes = [8, 32], strides = [1, 1]} : vector<8x96xf32> to vector<8x32xf32>
    %57 = vector.extract_strided_slice %47 {offsets = [0, 32], sizes = [8, 32], strides = [1, 1]} : vector<8x96xf32> to vector<8x32xf32>
    %58 = arith.addf %56, %57 : vector<8x32xf32>
    %59 = arith.negf %58 : vector<8x32xf32>
    %60 = math.exp %59 : vector<8x32xf32>
    %cst_12 = arith.constant 1.000000e+00 : f32
    %61 = vector.broadcast %cst_12 : f32 to vector<8x32xf32>
    %62 = arith.addf %61, %60 : vector<8x32xf32>
    %63 = arith.divf %61, %62 : vector<8x32xf32>
    %64 = vector.extract_strided_slice %43 {offsets = [0, 64], sizes = [8, 32], strides = [1, 1]} : vector<8x96xf32> to vector<8x32xf32>
    %65 = vector.extract_strided_slice %47 {offsets = [0, 64], sizes = [8, 32], strides = [1, 1]} : vector<8x96xf32> to vector<8x32xf32>
    %66 = arith.mulf %55, %65 : vector<8x32xf32>
    %67 = arith.addf %64, %66 : vector<8x32xf32>
    %68 = math.tanh %67 : vector<8x32xf32>
    %cst_13 = arith.constant 1.000000e+00 : f32
    %69 = vector.broadcast %cst_13 : f32 to vector<8x32xf32>
    %70 = arith.subf %69, %63 : vector<8x32xf32>
    %71 = arith.mulf %70, %68 : vector<8x32xf32>
    %72 = arith.mulf %63, %42 : vector<8x32xf32>
    %73 = arith.addf %71, %72 : vector<8x32xf32>
    %74 = vector.extract_strided_slice %13 {offsets = [16, 0], sizes = [8, 96], strides = [1, 1]} : vector<64x96xf32> to vector<8x96xf32>
    %75 = arith.truncf %73 : vector<8x32xf32> to vector<8x32xbf16>
    %cst_14 = arith.constant dense<0.000000e+00> : vector<8x96xf32>
    %76 = tpu.matmul %75, %14, %cst_14 {dimension_numbers = #tpu.dot_dimension_numbers<[1], [0], [0], [1], [0, 0, 1, 1], [], []>} : vector<8x32xbf16>, vector<32x96xbf16>, vector<8x96xf32> -> vector<8x96xf32>
    %77 = vector.broadcast %2 : vector<1x96xf32> to vector<8x96xf32>
    %78 = arith.addf %76, %77 : vector<8x96xf32>
    %79 = vector.extract_strided_slice %74 {offsets = [0, 0], sizes = [8, 32], strides = [1, 1]} : vector<8x96xf32> to vector<8x32xf32>
    %80 = vector.extract_strided_slice %78 {offsets = [0, 0], sizes = [8, 32], strides = [1, 1]} : vector<8x96xf32> to vector<8x32xf32>
    %81 = arith.addf %79, %80 : vector<8x32xf32>
    %82 = arith.negf %81 : vector<8x32xf32>
    %83 = math.exp %82 : vector<8x32xf32>
    %cst_15 = arith.constant 1.000000e+00 : f32
    %84 = vector.broadcast %cst_15 : f32 to vector<8x32xf32>
    %85 = arith.addf %84, %83 : vector<8x32xf32>
    %86 = arith.divf %84, %85 : vector<8x32xf32>
    %87 = vector.extract_strided_slice %74 {offsets = [0, 32], sizes = [8, 32], strides = [1, 1]} : vector<8x96xf32> to vector<8x32xf32>
    %88 = vector.extract_strided_slice %78 {offsets = [0, 32], sizes = [8, 32], strides = [1, 1]} : vector<8x96xf32> to vector<8x32xf32>
    %89 = arith.addf %87, %88 : vector<8x32xf32>
    %90 = arith.negf %89 : vector<8x32xf32>
    %91 = math.exp %90 : vector<8x32xf32>
    %cst_16 = arith.constant 1.000000e+00 : f32
    %92 = vector.broadcast %cst_16 : f32 to vector<8x32xf32>
    %93 = arith.addf %92, %91 : vector<8x32xf32>
    %94 = arith.divf %92, %93 : vector<8x32xf32>
    %95 = vector.extract_strided_slice %74 {offsets = [0, 64], sizes = [8, 32], strides = [1, 1]} : vector<8x96xf32> to vector<8x32xf32>
    %96 = vector.extract_strided_slice %78 {offsets = [0, 64], sizes = [8, 32], strides = [1, 1]} : vector<8x96xf32> to vector<8x32xf32>
    %97 = arith.mulf %86, %96 : vector<8x32xf32>
    %98 = arith.addf %95, %97 : vector<8x32xf32>
    %99 = math.tanh %98 : vector<8x32xf32>
    %cst_17 = arith.constant 1.000000e+00 : f32
    %100 = vector.broadcast %cst_17 : f32 to vector<8x32xf32>
    %101 = arith.subf %100, %94 : vector<8x32xf32>
    %102 = arith.mulf %101, %99 : vector<8x32xf32>
    %103 = arith.mulf %94, %73 : vector<8x32xf32>
    %104 = arith.addf %102, %103 : vector<8x32xf32>
    %105 = vector.extract_strided_slice %13 {offsets = [24, 0], sizes = [8, 96], strides = [1, 1]} : vector<64x96xf32> to vector<8x96xf32>
    %106 = arith.truncf %104 : vector<8x32xf32> to vector<8x32xbf16>
    %cst_18 = arith.constant dense<0.000000e+00> : vector<8x96xf32>
    %107 = tpu.matmul %106, %14, %cst_18 {dimension_numbers = #tpu.dot_dimension_numbers<[1], [0], [0], [1], [0, 0, 1, 1], [], []>} : vector<8x32xbf16>, vector<32x96xbf16>, vector<8x96xf32> -> vector<8x96xf32>
    %108 = vector.broadcast %2 : vector<1x96xf32> to vector<8x96xf32>
    %109 = arith.addf %107, %108 : vector<8x96xf32>
    %110 = vector.extract_strided_slice %105 {offsets = [0, 0], sizes = [8, 32], strides = [1, 1]} : vector<8x96xf32> to vector<8x32xf32>
    %111 = vector.extract_strided_slice %109 {offsets = [0, 0], sizes = [8, 32], strides = [1, 1]} : vector<8x96xf32> to vector<8x32xf32>
    %112 = arith.addf %110, %111 : vector<8x32xf32>
    %113 = arith.negf %112 : vector<8x32xf32>
    %114 = math.exp %113 : vector<8x32xf32>
    %cst_19 = arith.constant 1.000000e+00 : f32
    %115 = vector.broadcast %cst_19 : f32 to vector<8x32xf32>
    %116 = arith.addf %115, %114 : vector<8x32xf32>
    %117 = arith.divf %115, %116 : vector<8x32xf32>
    %118 = vector.extract_strided_slice %105 {offsets = [0, 32], sizes = [8, 32], strides = [1, 1]} : vector<8x96xf32> to vector<8x32xf32>
    %119 = vector.extract_strided_slice %109 {offsets = [0, 32], sizes = [8, 32], strides = [1, 1]} : vector<8x96xf32> to vector<8x32xf32>
    %120 = arith.addf %118, %119 : vector<8x32xf32>
    %121 = arith.negf %120 : vector<8x32xf32>
    %122 = math.exp %121 : vector<8x32xf32>
    %cst_20 = arith.constant 1.000000e+00 : f32
    %123 = vector.broadcast %cst_20 : f32 to vector<8x32xf32>
    %124 = arith.addf %123, %122 : vector<8x32xf32>
    %125 = arith.divf %123, %124 : vector<8x32xf32>
    %126 = vector.extract_strided_slice %105 {offsets = [0, 64], sizes = [8, 32], strides = [1, 1]} : vector<8x96xf32> to vector<8x32xf32>
    %127 = vector.extract_strided_slice %109 {offsets = [0, 64], sizes = [8, 32], strides = [1, 1]} : vector<8x96xf32> to vector<8x32xf32>
    %128 = arith.mulf %117, %127 : vector<8x32xf32>
    %129 = arith.addf %126, %128 : vector<8x32xf32>
    %130 = math.tanh %129 : vector<8x32xf32>
    %cst_21 = arith.constant 1.000000e+00 : f32
    %131 = vector.broadcast %cst_21 : f32 to vector<8x32xf32>
    %132 = arith.subf %131, %125 : vector<8x32xf32>
    %133 = arith.mulf %132, %130 : vector<8x32xf32>
    %134 = arith.mulf %125, %104 : vector<8x32xf32>
    %135 = arith.addf %133, %134 : vector<8x32xf32>
    %136 = vector.extract_strided_slice %13 {offsets = [32, 0], sizes = [8, 96], strides = [1, 1]} : vector<64x96xf32> to vector<8x96xf32>
    %137 = arith.truncf %135 : vector<8x32xf32> to vector<8x32xbf16>
    %cst_22 = arith.constant dense<0.000000e+00> : vector<8x96xf32>
    %138 = tpu.matmul %137, %14, %cst_22 {dimension_numbers = #tpu.dot_dimension_numbers<[1], [0], [0], [1], [0, 0, 1, 1], [], []>} : vector<8x32xbf16>, vector<32x96xbf16>, vector<8x96xf32> -> vector<8x96xf32>
    %139 = vector.broadcast %2 : vector<1x96xf32> to vector<8x96xf32>
    %140 = arith.addf %138, %139 : vector<8x96xf32>
    %141 = vector.extract_strided_slice %136 {offsets = [0, 0], sizes = [8, 32], strides = [1, 1]} : vector<8x96xf32> to vector<8x32xf32>
    %142 = vector.extract_strided_slice %140 {offsets = [0, 0], sizes = [8, 32], strides = [1, 1]} : vector<8x96xf32> to vector<8x32xf32>
    %143 = arith.addf %141, %142 : vector<8x32xf32>
    %144 = arith.negf %143 : vector<8x32xf32>
    %145 = math.exp %144 : vector<8x32xf32>
    %cst_23 = arith.constant 1.000000e+00 : f32
    %146 = vector.broadcast %cst_23 : f32 to vector<8x32xf32>
    %147 = arith.addf %146, %145 : vector<8x32xf32>
    %148 = arith.divf %146, %147 : vector<8x32xf32>
    %149 = vector.extract_strided_slice %136 {offsets = [0, 32], sizes = [8, 32], strides = [1, 1]} : vector<8x96xf32> to vector<8x32xf32>
    %150 = vector.extract_strided_slice %140 {offsets = [0, 32], sizes = [8, 32], strides = [1, 1]} : vector<8x96xf32> to vector<8x32xf32>
    %151 = arith.addf %149, %150 : vector<8x32xf32>
    %152 = arith.negf %151 : vector<8x32xf32>
    %153 = math.exp %152 : vector<8x32xf32>
    %cst_24 = arith.constant 1.000000e+00 : f32
    %154 = vector.broadcast %cst_24 : f32 to vector<8x32xf32>
    %155 = arith.addf %154, %153 : vector<8x32xf32>
    %156 = arith.divf %154, %155 : vector<8x32xf32>
    %157 = vector.extract_strided_slice %136 {offsets = [0, 64], sizes = [8, 32], strides = [1, 1]} : vector<8x96xf32> to vector<8x32xf32>
    %158 = vector.extract_strided_slice %140 {offsets = [0, 64], sizes = [8, 32], strides = [1, 1]} : vector<8x96xf32> to vector<8x32xf32>
    %159 = arith.mulf %148, %158 : vector<8x32xf32>
    %160 = arith.addf %157, %159 : vector<8x32xf32>
    %161 = math.tanh %160 : vector<8x32xf32>
    %cst_25 = arith.constant 1.000000e+00 : f32
    %162 = vector.broadcast %cst_25 : f32 to vector<8x32xf32>
    %163 = arith.subf %162, %156 : vector<8x32xf32>
    %164 = arith.mulf %163, %161 : vector<8x32xf32>
    %165 = arith.mulf %156, %135 : vector<8x32xf32>
    %166 = arith.addf %164, %165 : vector<8x32xf32>
    %167 = vector.extract_strided_slice %13 {offsets = [40, 0], sizes = [8, 96], strides = [1, 1]} : vector<64x96xf32> to vector<8x96xf32>
    %168 = arith.truncf %166 : vector<8x32xf32> to vector<8x32xbf16>
    %cst_26 = arith.constant dense<0.000000e+00> : vector<8x96xf32>
    %169 = tpu.matmul %168, %14, %cst_26 {dimension_numbers = #tpu.dot_dimension_numbers<[1], [0], [0], [1], [0, 0, 1, 1], [], []>} : vector<8x32xbf16>, vector<32x96xbf16>, vector<8x96xf32> -> vector<8x96xf32>
    %170 = vector.broadcast %2 : vector<1x96xf32> to vector<8x96xf32>
    %171 = arith.addf %169, %170 : vector<8x96xf32>
    %172 = vector.extract_strided_slice %167 {offsets = [0, 0], sizes = [8, 32], strides = [1, 1]} : vector<8x96xf32> to vector<8x32xf32>
    %173 = vector.extract_strided_slice %171 {offsets = [0, 0], sizes = [8, 32], strides = [1, 1]} : vector<8x96xf32> to vector<8x32xf32>
    %174 = arith.addf %172, %173 : vector<8x32xf32>
    %175 = arith.negf %174 : vector<8x32xf32>
    %176 = math.exp %175 : vector<8x32xf32>
    %cst_27 = arith.constant 1.000000e+00 : f32
    %177 = vector.broadcast %cst_27 : f32 to vector<8x32xf32>
    %178 = arith.addf %177, %176 : vector<8x32xf32>
    %179 = arith.divf %177, %178 : vector<8x32xf32>
    %180 = vector.extract_strided_slice %167 {offsets = [0, 32], sizes = [8, 32], strides = [1, 1]} : vector<8x96xf32> to vector<8x32xf32>
    %181 = vector.extract_strided_slice %171 {offsets = [0, 32], sizes = [8, 32], strides = [1, 1]} : vector<8x96xf32> to vector<8x32xf32>
    %182 = arith.addf %180, %181 : vector<8x32xf32>
    %183 = arith.negf %182 : vector<8x32xf32>
    %184 = math.exp %183 : vector<8x32xf32>
    %cst_28 = arith.constant 1.000000e+00 : f32
    %185 = vector.broadcast %cst_28 : f32 to vector<8x32xf32>
    %186 = arith.addf %185, %184 : vector<8x32xf32>
    %187 = arith.divf %185, %186 : vector<8x32xf32>
    %188 = vector.extract_strided_slice %167 {offsets = [0, 64], sizes = [8, 32], strides = [1, 1]} : vector<8x96xf32> to vector<8x32xf32>
    %189 = vector.extract_strided_slice %171 {offsets = [0, 64], sizes = [8, 32], strides = [1, 1]} : vector<8x96xf32> to vector<8x32xf32>
    %190 = arith.mulf %179, %189 : vector<8x32xf32>
    %191 = arith.addf %188, %190 : vector<8x32xf32>
    %192 = math.tanh %191 : vector<8x32xf32>
    %cst_29 = arith.constant 1.000000e+00 : f32
    %193 = vector.broadcast %cst_29 : f32 to vector<8x32xf32>
    %194 = arith.subf %193, %187 : vector<8x32xf32>
    %195 = arith.mulf %194, %192 : vector<8x32xf32>
    %196 = arith.mulf %187, %166 : vector<8x32xf32>
    %197 = arith.addf %195, %196 : vector<8x32xf32>
    %198 = vector.extract_strided_slice %13 {offsets = [48, 0], sizes = [8, 96], strides = [1, 1]} : vector<64x96xf32> to vector<8x96xf32>
    %199 = arith.truncf %197 : vector<8x32xf32> to vector<8x32xbf16>
    %cst_30 = arith.constant dense<0.000000e+00> : vector<8x96xf32>
    %200 = tpu.matmul %199, %14, %cst_30 {dimension_numbers = #tpu.dot_dimension_numbers<[1], [0], [0], [1], [0, 0, 1, 1], [], []>} : vector<8x32xbf16>, vector<32x96xbf16>, vector<8x96xf32> -> vector<8x96xf32>
    %201 = vector.broadcast %2 : vector<1x96xf32> to vector<8x96xf32>
    %202 = arith.addf %200, %201 : vector<8x96xf32>
    %203 = vector.extract_strided_slice %198 {offsets = [0, 0], sizes = [8, 32], strides = [1, 1]} : vector<8x96xf32> to vector<8x32xf32>
    %204 = vector.extract_strided_slice %202 {offsets = [0, 0], sizes = [8, 32], strides = [1, 1]} : vector<8x96xf32> to vector<8x32xf32>
    %205 = arith.addf %203, %204 : vector<8x32xf32>
    %206 = arith.negf %205 : vector<8x32xf32>
    %207 = math.exp %206 : vector<8x32xf32>
    %cst_31 = arith.constant 1.000000e+00 : f32
    %208 = vector.broadcast %cst_31 : f32 to vector<8x32xf32>
    %209 = arith.addf %208, %207 : vector<8x32xf32>
    %210 = arith.divf %208, %209 : vector<8x32xf32>
    %211 = vector.extract_strided_slice %198 {offsets = [0, 32], sizes = [8, 32], strides = [1, 1]} : vector<8x96xf32> to vector<8x32xf32>
    %212 = vector.extract_strided_slice %202 {offsets = [0, 32], sizes = [8, 32], strides = [1, 1]} : vector<8x96xf32> to vector<8x32xf32>
    %213 = arith.addf %211, %212 : vector<8x32xf32>
    %214 = arith.negf %213 : vector<8x32xf32>
    %215 = math.exp %214 : vector<8x32xf32>
    %cst_32 = arith.constant 1.000000e+00 : f32
    %216 = vector.broadcast %cst_32 : f32 to vector<8x32xf32>
    %217 = arith.addf %216, %215 : vector<8x32xf32>
    %218 = arith.divf %216, %217 : vector<8x32xf32>
    %219 = vector.extract_strided_slice %198 {offsets = [0, 64], sizes = [8, 32], strides = [1, 1]} : vector<8x96xf32> to vector<8x32xf32>
    %220 = vector.extract_strided_slice %202 {offsets = [0, 64], sizes = [8, 32], strides = [1, 1]} : vector<8x96xf32> to vector<8x32xf32>
    %221 = arith.mulf %210, %220 : vector<8x32xf32>
    %222 = arith.addf %219, %221 : vector<8x32xf32>
    %223 = math.tanh %222 : vector<8x32xf32>
    %cst_33 = arith.constant 1.000000e+00 : f32
    %224 = vector.broadcast %cst_33 : f32 to vector<8x32xf32>
    %225 = arith.subf %224, %218 : vector<8x32xf32>
    %226 = arith.mulf %225, %223 : vector<8x32xf32>
    %227 = arith.mulf %218, %197 : vector<8x32xf32>
    %228 = arith.addf %226, %227 : vector<8x32xf32>
    %229 = vector.extract_strided_slice %13 {offsets = [56, 0], sizes = [8, 96], strides = [1, 1]} : vector<64x96xf32> to vector<8x96xf32>
    %230 = arith.truncf %228 : vector<8x32xf32> to vector<8x32xbf16>
    %cst_34 = arith.constant dense<0.000000e+00> : vector<8x96xf32>
    %231 = tpu.matmul %230, %14, %cst_34 {dimension_numbers = #tpu.dot_dimension_numbers<[1], [0], [0], [1], [0, 0, 1, 1], [], []>} : vector<8x32xbf16>, vector<32x96xbf16>, vector<8x96xf32> -> vector<8x96xf32>
    %232 = vector.broadcast %2 : vector<1x96xf32> to vector<8x96xf32>
    %233 = arith.addf %231, %232 : vector<8x96xf32>
    %234 = vector.extract_strided_slice %229 {offsets = [0, 0], sizes = [8, 32], strides = [1, 1]} : vector<8x96xf32> to vector<8x32xf32>
    %235 = vector.extract_strided_slice %233 {offsets = [0, 0], sizes = [8, 32], strides = [1, 1]} : vector<8x96xf32> to vector<8x32xf32>
    %236 = arith.addf %234, %235 : vector<8x32xf32>
    %237 = arith.negf %236 : vector<8x32xf32>
    %238 = math.exp %237 : vector<8x32xf32>
    %cst_35 = arith.constant 1.000000e+00 : f32
    %239 = vector.broadcast %cst_35 : f32 to vector<8x32xf32>
    %240 = arith.addf %239, %238 : vector<8x32xf32>
    %241 = arith.divf %239, %240 : vector<8x32xf32>
    %242 = vector.extract_strided_slice %229 {offsets = [0, 32], sizes = [8, 32], strides = [1, 1]} : vector<8x96xf32> to vector<8x32xf32>
    %243 = vector.extract_strided_slice %233 {offsets = [0, 32], sizes = [8, 32], strides = [1, 1]} : vector<8x96xf32> to vector<8x32xf32>
    %244 = arith.addf %242, %243 : vector<8x32xf32>
    %245 = arith.negf %244 : vector<8x32xf32>
    %246 = math.exp %245 : vector<8x32xf32>
    %cst_36 = arith.constant 1.000000e+00 : f32
    %247 = vector.broadcast %cst_36 : f32 to vector<8x32xf32>
    %248 = arith.addf %247, %246 : vector<8x32xf32>
    %249 = arith.divf %247, %248 : vector<8x32xf32>
    %250 = vector.extract_strided_slice %229 {offsets = [0, 64], sizes = [8, 32], strides = [1, 1]} : vector<8x96xf32> to vector<8x32xf32>
    %251 = vector.extract_strided_slice %233 {offsets = [0, 64], sizes = [8, 32], strides = [1, 1]} : vector<8x96xf32> to vector<8x32xf32>
    %252 = arith.mulf %241, %251 : vector<8x32xf32>
    %253 = arith.addf %250, %252 : vector<8x32xf32>
    %254 = math.tanh %253 : vector<8x32xf32>
    %cst_37 = arith.constant 1.000000e+00 : f32
    %255 = vector.broadcast %cst_37 : f32 to vector<8x32xf32>
    %256 = arith.subf %255, %249 : vector<8x32xf32>
    %257 = arith.mulf %256, %254 : vector<8x32xf32>
    %258 = arith.mulf %249, %228 : vector<8x32xf32>
    %259 = arith.addf %257, %258 : vector<8x32xf32>
    %260 = vector.shape_cast %42 : vector<8x32xf32> to vector<1x8x32xf32>
    %261 = vector.shape_cast %73 : vector<8x32xf32> to vector<1x8x32xf32>
    %262 = vector.shape_cast %104 : vector<8x32xf32> to vector<1x8x32xf32>
    %263 = vector.shape_cast %135 : vector<8x32xf32> to vector<1x8x32xf32>
    %264 = vector.shape_cast %166 : vector<8x32xf32> to vector<1x8x32xf32>
    %265 = vector.shape_cast %197 : vector<8x32xf32> to vector<1x8x32xf32>
    %266 = vector.shape_cast %228 : vector<8x32xf32> to vector<1x8x32xf32>
    %267 = vector.shape_cast %259 : vector<8x32xf32> to vector<1x8x32xf32>
    %268 = tpu.concatenate %260, %261, %262, %263, %264, %265, %266, %267 in 0 : vector<1x8x32xf32>, vector<1x8x32xf32>, vector<1x8x32xf32>, vector<1x8x32xf32>, vector<1x8x32xf32>, vector<1x8x32xf32>, vector<1x8x32xf32>, vector<1x8x32xf32> -> vector<8x8x32xf32>
    %269 = vector.shape_cast %268 : vector<8x8x32xf32> to vector<64x32xf32>
    %270 = arith.truncf %269 : vector<64x32xf32> to vector<64x32xbf16>
    %c0_38 = arith.constant 0 : index
    %c0_39 = arith.constant 0 : index
    %271 = vector.load %arg5[%c0_38, %c0_39] : memref<32x32xbf16, #tpu.memory_space<vmem>>, vector<32x32xbf16>
    %cst_40 = arith.constant dense<0.000000e+00> : vector<64x32xf32>
    %272 = tpu.matmul %270, %271, %cst_40 {dimension_numbers = #tpu.dot_dimension_numbers<[1], [0], [0], [1], [0, 0, 1, 1], [], []>} : vector<64x32xbf16>, vector<32x32xbf16>, vector<64x32xf32> -> vector<64x32xf32>
    %273 = vector.shape_cast %272 : vector<64x32xf32> to vector<8x8x32xf32>
    %274 = vector.shape_cast %5 : vector<1x32xf32> to vector<1x1x32xf32>
    %275 = vector.broadcast %274 : vector<1x1x32xf32> to vector<8x8x32xf32>
    %276 = arith.addf %273, %275 : vector<8x8x32xf32>
    %277 = arith.truncf %259 : vector<8x32xf32> to vector<8x32xbf16>
    %c0_41 = arith.constant 0 : index
    %c0_42 = arith.constant 0 : index
    %278 = vector.load %arg6[%c0_41, %c0_42] : memref<32x32xbf16, #tpu.memory_space<vmem>>, vector<32x32xbf16>
    %cst_43 = arith.constant dense<0.000000e+00> : vector<8x32xf32>
    %279 = tpu.matmul %277, %278, %cst_43 {dimension_numbers = #tpu.dot_dimension_numbers<[1], [0], [0], [1], [0, 0, 1, 1], [], []>} : vector<8x32xbf16>, vector<32x32xbf16>, vector<8x32xf32> -> vector<8x32xf32>
    %280 = vector.broadcast %6 : vector<1x32xf32> to vector<8x32xf32>
    %281 = arith.addf %279, %280 : vector<8x32xf32>
    %282 = vector.shape_cast %281 : vector<8x32xf32> to vector<1x8x32xf32>
    %283 = vector.broadcast %282 : vector<1x8x32xf32> to vector<8x8x32xf32>
    %284 = arith.addf %276, %283 : vector<8x8x32xf32>
    %285 = math.tanh %284 : vector<8x8x32xf32>
    %286 = vector.shape_cast %7 : vector<1x32xf32> to vector<1x1x32xf32>
    %287 = vector.broadcast %286 : vector<1x1x32xf32> to vector<8x8x32xf32>
    %288 = arith.mulf %285, %287 : vector<8x8x32xf32>
    %cst_44 = arith.constant dense<0.000000e+00> : vector<8x8xf32>
    %289 = vector.multi_reduction <add>, %288, %cst_44 [2] : vector<8x8x32xf32> to vector<8x8xf32>
    %290 = vector.shape_cast %289 : vector<8x8xf32> to vector<8x8x1xf32>
    %cst_45 = arith.constant dense<0xFF800000> : vector<8x1xf32>
    %291 = vector.multi_reduction <maximumf>, %290, %cst_45 [0] : vector<8x8x1xf32> to vector<8x1xf32>
    %292 = vector.shape_cast %291 : vector<8x1xf32> to vector<1x8x1xf32>
    %293 = vector.broadcast %292 : vector<1x8x1xf32> to vector<8x8x1xf32>
    %294 = arith.subf %290, %293 : vector<8x8x1xf32>
    %295 = math.exp %294 : vector<8x8x1xf32>
    %cst_46 = arith.constant dense<0.000000e+00> : vector<8x1xf32>
    %296 = vector.multi_reduction <add>, %295, %cst_46 [0] : vector<8x8x1xf32> to vector<8x1xf32>
    %297 = vector.shape_cast %296 : vector<8x1xf32> to vector<1x8x1xf32>
    %298 = tpu.reciprocal %297 {approx = true} : vector<1x8x1xf32> -> vector<1x8x1xf32>
    %299 = vector.broadcast %298 : vector<1x8x1xf32> to vector<8x8x1xf32>
    %300 = arith.mulf %295, %299 : vector<8x8x1xf32>
    %301 = vector.broadcast %300 : vector<8x8x1xf32> to vector<8x8x32xf32>
    %302 = arith.mulf %301, %268 : vector<8x8x32xf32>
    %cst_47 = arith.constant dense<0.000000e+00> : vector<8x32xf32>
    %303 = vector.multi_reduction <add>, %302, %cst_47 [0] : vector<8x8x32xf32> to vector<8x32xf32>
    %c0_48 = arith.constant 0 : index
    %c0_49 = arith.constant 0 : index
    %304 = vector.load %arg1[%c0_48, %c0_49] : memref<8x16xbf16, #tpu.memory_space<vmem>>, vector<8x16xbf16>
    %c0_50 = arith.constant 0 : index
    %c0_51 = arith.constant 0 : index
    %305 = vector.load %arg7[%c0_50, %c0_51] : memref<16x96xbf16, #tpu.memory_space<vmem>>, vector<16x96xbf16>
    %cst_52 = arith.constant dense<0.000000e+00> : vector<8x96xf32>
    %306 = tpu.matmul %304, %305, %cst_52 {dimension_numbers = #tpu.dot_dimension_numbers<[1], [0], [0], [1], [0, 0, 1, 1], [], []>} : vector<8x16xbf16>, vector<16x96xbf16>, vector<8x96xf32> -> vector<8x96xf32>
    %307 = arith.truncf %303 : vector<8x32xf32> to vector<8x32xbf16>
    %c0_53 = arith.constant 0 : index
    %c0_54 = arith.constant 0 : index
    %308 = vector.load %arg8[%c0_53, %c0_54] : memref<32x96xbf16, #tpu.memory_space<vmem>>, vector<32x96xbf16>
    %cst_55 = arith.constant dense<0.000000e+00> : vector<8x96xf32>
    %309 = tpu.matmul %307, %308, %cst_55 {dimension_numbers = #tpu.dot_dimension_numbers<[1], [0], [0], [1], [0, 0, 1, 1], [], []>} : vector<8x32xbf16>, vector<32x96xbf16>, vector<8x96xf32> -> vector<8x96xf32>
    %310 = arith.addf %306, %309 : vector<8x96xf32>
    %311 = vector.broadcast %3 : vector<1x96xf32> to vector<8x96xf32>
    %312 = arith.addf %310, %311 : vector<8x96xf32>
    %313 = vector.extract_strided_slice %312 {offsets = [0, 0], sizes = [8, 32], strides = [1, 1]} : vector<8x96xf32> to vector<8x32xf32>
    %314 = vector.extract_strided_slice %4 {offsets = [0, 0], sizes = [1, 32], strides = [1, 1]} : vector<1x96xf32> to vector<1x32xf32>
    %315 = vector.broadcast %314 : vector<1x32xf32> to vector<8x32xf32>
    %316 = arith.addf %313, %315 : vector<8x32xf32>
    %317 = arith.negf %316 : vector<8x32xf32>
    %318 = math.exp %317 : vector<8x32xf32>
    %cst_56 = arith.constant 1.000000e+00 : f32
    %319 = vector.broadcast %cst_56 : f32 to vector<8x32xf32>
    %320 = arith.addf %319, %318 : vector<8x32xf32>
    %321 = arith.divf %319, %320 : vector<8x32xf32>
    %322 = vector.extract_strided_slice %312 {offsets = [0, 32], sizes = [8, 32], strides = [1, 1]} : vector<8x96xf32> to vector<8x32xf32>
    %323 = vector.extract_strided_slice %4 {offsets = [0, 32], sizes = [1, 32], strides = [1, 1]} : vector<1x96xf32> to vector<1x32xf32>
    %324 = vector.broadcast %323 : vector<1x32xf32> to vector<8x32xf32>
    %325 = arith.addf %322, %324 : vector<8x32xf32>
    %326 = arith.negf %325 : vector<8x32xf32>
    %327 = math.exp %326 : vector<8x32xf32>
    %cst_57 = arith.constant 1.000000e+00 : f32
    %328 = vector.broadcast %cst_57 : f32 to vector<8x32xf32>
    %329 = arith.addf %328, %327 : vector<8x32xf32>
    %330 = arith.divf %328, %329 : vector<8x32xf32>
    %331 = vector.extract_strided_slice %312 {offsets = [0, 64], sizes = [8, 32], strides = [1, 1]} : vector<8x96xf32> to vector<8x32xf32>
    %332 = vector.extract_strided_slice %4 {offsets = [0, 64], sizes = [1, 32], strides = [1, 1]} : vector<1x96xf32> to vector<1x32xf32>
    %333 = vector.broadcast %332 : vector<1x32xf32> to vector<8x32xf32>
    %334 = arith.mulf %321, %333 : vector<8x32xf32>
    %335 = arith.addf %331, %334 : vector<8x32xf32>
    %336 = math.tanh %335 : vector<8x32xf32>
    %cst_58 = arith.constant 1.000000e+00 : f32
    %337 = vector.broadcast %cst_58 : f32 to vector<8x32xf32>
    %338 = arith.subf %337, %330 : vector<8x32xf32>
    %339 = arith.mulf %338, %336 : vector<8x32xf32>
    %340 = arith.truncf %339 : vector<8x32xf32> to vector<8x32xbf16>
    %c0_59 = arith.constant 0 : index
    %c0_60 = arith.constant 0 : index
    %341 = vector.load %arg9[%c0_59, %c0_60] : memref<32x32xbf16, #tpu.memory_space<vmem>>, vector<32x32xbf16>
    %cst_61 = arith.constant dense<0.000000e+00> : vector<8x32xf32>
    %342 = tpu.matmul %340, %341, %cst_61 {dimension_numbers = #tpu.dot_dimension_numbers<[1], [0], [0], [1], [0, 0, 1, 1], [], []>} : vector<8x32xbf16>, vector<32x32xbf16>, vector<8x32xf32> -> vector<8x32xf32>
    %343 = vector.broadcast %8 : vector<1x32xf32> to vector<8x32xf32>
    %344 = arith.addf %342, %343 : vector<8x32xf32>
    %cst_62 = arith.constant dense<0xFF800000> : vector<8xf32>
    %345 = vector.multi_reduction <maximumf>, %344, %cst_62 [1] : vector<8x32xf32> to vector<8xf32>
    %346 = vector.shape_cast %345 : vector<8xf32> to vector<8x1xf32>
    %347 = vector.broadcast %346 : vector<8x1xf32> to vector<8x32xf32>
    %348 = arith.subf %344, %347 : vector<8x32xf32>
    %349 = math.exp %348 : vector<8x32xf32>
    %cst_63 = arith.constant dense<0.000000e+00> : vector<8xf32>
    %350 = vector.multi_reduction <add>, %349, %cst_63 [1] : vector<8x32xf32> to vector<8xf32>
    %351 = vector.shape_cast %350 : vector<8xf32> to vector<8x1xf32>
    %352 = math.log %351 : vector<8x1xf32>
    %353 = arith.addf %352, %346 : vector<8x1xf32>
    %354 = vector.broadcast %353 : vector<8x1xf32> to vector<8x32xf32>
    %355 = arith.subf %344, %354 : vector<8x32xf32>
    %c0_64 = arith.constant 0 : index
    %c0_65 = arith.constant 0 : index
    %356 = vector.load %arg2[%c0_64, %c0_65] : memref<8x8xi32, #tpu.memory_space<vmem>>, vector<8x8xi32>
    %c0_i32 = arith.constant 0 : i32
    %357 = vector.broadcast %c0_i32 : i32 to vector<8x8xi32>
    %358 = arith.cmpi ne, %356, %357 : vector<8x8xi32>
    %359 = arith.extui %358 : vector<8x8xi1> to vector<8x8xi32>
    %360 = arith.sitofp %359 : vector<8x8xi32> to vector<8x8xf32>
    %cst_66 = arith.constant dense<0.000000e+00> : vector<8xf32>
    %361 = vector.multi_reduction <add>, %360, %cst_66 [0] : vector<8x8xf32> to vector<8xf32>
    %362 = vector.shape_cast %361 : vector<8xf32> to vector<1x8xf32>
    %363 = tpu.iota {dimensions = array<i32: 1>} : vector<8x32xi32>
    %cst_67 = arith.constant 0.000000e+00 : f32
    %364 = vector.broadcast %cst_67 : f32 to vector<8x32xf32>
    %365 = vector.extract_strided_slice %356 {offsets = [0, 1], sizes = [8, 1], strides = [1, 1]} : vector<8x8xi32> to vector<8x1xi32>
    %366 = vector.broadcast %365 : vector<8x1xi32> to vector<8x32xi32>
    %367 = arith.cmpi eq, %363, %366 : vector<8x32xi32>
    %368 = vector.extract_strided_slice %362 {offsets = [0, 1], sizes = [1, 1], strides = [1, 1]} : vector<1x8xf32> to vector<1x1xf32>
    %cst_68 = arith.constant 0.000000e+00 : f32
    %369 = vector.shape_cast %368 : vector<1x1xf32> to vector<1x1xf32>
    %370 = vector.broadcast %369 : vector<1x1xf32> to vector<8x32xf32>
    %371 = vector.broadcast %cst_68 : f32 to vector<8x32xf32>
    %372 = arith.select %367, %370, %371 : vector<8x32xi1>, vector<8x32xf32>
    %373 = arith.addf %364, %372 : vector<8x32xf32>
    %374 = vector.extract_strided_slice %356 {offsets = [0, 2], sizes = [8, 1], strides = [1, 1]} : vector<8x8xi32> to vector<8x1xi32>
    %375 = vector.broadcast %374 : vector<8x1xi32> to vector<8x32xi32>
    %376 = arith.cmpi eq, %363, %375 : vector<8x32xi32>
    %377 = vector.extract_strided_slice %362 {offsets = [0, 2], sizes = [1, 1], strides = [1, 1]} : vector<1x8xf32> to vector<1x1xf32>
    %cst_69 = arith.constant 0.000000e+00 : f32
    %378 = vector.shape_cast %377 : vector<1x1xf32> to vector<1x1xf32>
    %379 = vector.broadcast %378 : vector<1x1xf32> to vector<8x32xf32>
    %380 = vector.broadcast %cst_69 : f32 to vector<8x32xf32>
    %381 = arith.select %376, %379, %380 : vector<8x32xi1>, vector<8x32xf32>
    %382 = arith.addf %373, %381 : vector<8x32xf32>
    %383 = vector.extract_strided_slice %356 {offsets = [0, 3], sizes = [8, 1], strides = [1, 1]} : vector<8x8xi32> to vector<8x1xi32>
    %384 = vector.broadcast %383 : vector<8x1xi32> to vector<8x32xi32>
    %385 = arith.cmpi eq, %363, %384 : vector<8x32xi32>
    %386 = vector.extract_strided_slice %362 {offsets = [0, 3], sizes = [1, 1], strides = [1, 1]} : vector<1x8xf32> to vector<1x1xf32>
    %cst_70 = arith.constant 0.000000e+00 : f32
    %387 = vector.shape_cast %386 : vector<1x1xf32> to vector<1x1xf32>
    %388 = vector.broadcast %387 : vector<1x1xf32> to vector<8x32xf32>
    %389 = vector.broadcast %cst_70 : f32 to vector<8x32xf32>
    %390 = arith.select %385, %388, %389 : vector<8x32xi1>, vector<8x32xf32>
    %391 = arith.addf %382, %390 : vector<8x32xf32>
    %392 = vector.extract_strided_slice %356 {offsets = [0, 4], sizes = [8, 1], strides = [1, 1]} : vector<8x8xi32> to vector<8x1xi32>
    %393 = vector.broadcast %392 : vector<8x1xi32> to vector<8x32xi32>
    %394 = arith.cmpi eq, %363, %393 : vector<8x32xi32>
    %395 = vector.extract_strided_slice %362 {offsets = [0, 4], sizes = [1, 1], strides = [1, 1]} : vector<1x8xf32> to vector<1x1xf32>
    %cst_71 = arith.constant 0.000000e+00 : f32
    %396 = vector.shape_cast %395 : vector<1x1xf32> to vector<1x1xf32>
    %397 = vector.broadcast %396 : vector<1x1xf32> to vector<8x32xf32>
    %398 = vector.broadcast %cst_71 : f32 to vector<8x32xf32>
    %399 = arith.select %394, %397, %398 : vector<8x32xi1>, vector<8x32xf32>
    %400 = arith.addf %391, %399 : vector<8x32xf32>
    %401 = vector.extract_strided_slice %356 {offsets = [0, 5], sizes = [8, 1], strides = [1, 1]} : vector<8x8xi32> to vector<8x1xi32>
    %402 = vector.broadcast %401 : vector<8x1xi32> to vector<8x32xi32>
    %403 = arith.cmpi eq, %363, %402 : vector<8x32xi32>
    %404 = vector.extract_strided_slice %362 {offsets = [0, 5], sizes = [1, 1], strides = [1, 1]} : vector<1x8xf32> to vector<1x1xf32>
    %cst_72 = arith.constant 0.000000e+00 : f32
    %405 = vector.shape_cast %404 : vector<1x1xf32> to vector<1x1xf32>
    %406 = vector.broadcast %405 : vector<1x1xf32> to vector<8x32xf32>
    %407 = vector.broadcast %cst_72 : f32 to vector<8x32xf32>
    %408 = arith.select %403, %406, %407 : vector<8x32xi1>, vector<8x32xf32>
    %409 = arith.addf %400, %408 : vector<8x32xf32>
    %410 = vector.extract_strided_slice %356 {offsets = [0, 6], sizes = [8, 1], strides = [1, 1]} : vector<8x8xi32> to vector<8x1xi32>
    %411 = vector.broadcast %410 : vector<8x1xi32> to vector<8x32xi32>
    %412 = arith.cmpi eq, %363, %411 : vector<8x32xi32>
    %413 = vector.extract_strided_slice %362 {offsets = [0, 6], sizes = [1, 1], strides = [1, 1]} : vector<1x8xf32> to vector<1x1xf32>
    %cst_73 = arith.constant 0.000000e+00 : f32
    %414 = vector.shape_cast %413 : vector<1x1xf32> to vector<1x1xf32>
    %415 = vector.broadcast %414 : vector<1x1xf32> to vector<8x32xf32>
    %416 = vector.broadcast %cst_73 : f32 to vector<8x32xf32>
    %417 = arith.select %412, %415, %416 : vector<8x32xi1>, vector<8x32xf32>
    %418 = arith.addf %409, %417 : vector<8x32xf32>
    %419 = vector.extract_strided_slice %356 {offsets = [0, 7], sizes = [8, 1], strides = [1, 1]} : vector<8x8xi32> to vector<8x1xi32>
    %420 = vector.broadcast %419 : vector<8x1xi32> to vector<8x32xi32>
    %421 = arith.cmpi eq, %363, %420 : vector<8x32xi32>
    %422 = vector.extract_strided_slice %362 {offsets = [0, 7], sizes = [1, 1], strides = [1, 1]} : vector<1x8xf32> to vector<1x1xf32>
    %cst_74 = arith.constant 0.000000e+00 : f32
    %423 = vector.shape_cast %422 : vector<1x1xf32> to vector<1x1xf32>
    %424 = vector.broadcast %423 : vector<1x1xf32> to vector<8x32xf32>
    %425 = vector.broadcast %cst_74 : f32 to vector<8x32xf32>
    %426 = arith.select %421, %424, %425 : vector<8x32xi1>, vector<8x32xf32>
    %427 = arith.addf %418, %426 : vector<8x32xf32>
    %428 = tpu.iota {dimensions = array<i32: 0>} : vector<8x32xi32>
    %c4_i32 = arith.constant 4 : i32
    %429 = vector.broadcast %c4_i32 : i32 to vector<8x32xi32>
    %430 = arith.cmpi slt, %428, %429 : vector<8x32xi32>
    %cst_75 = arith.constant 0.000000e+00 : f32
    %431 = vector.broadcast %cst_75 : f32 to vector<8x32xf32>
    %432 = arith.select %430, %427, %431 : vector<8x32xi1>, vector<8x32xf32>
    %433 = arith.mulf %355, %432 : vector<8x32xf32>
    %434 = vector.shape_cast %433 : vector<8x32xf32> to vector<1x8x32xf32>
    %cst_76 = arith.constant dense<0.000000e+00> : vector<1xf32>
    %435 = vector.multi_reduction <add>, %434, %cst_76 [1, 2] : vector<1x8x32xf32> to vector<1xf32>
    %436 = vector.shape_cast %435 : vector<1xf32> to vector<1x1x1xf32>
    %437 = vector.extract %436[0, 0, 0] : f32 from vector<1x1x1xf32>
    %cst_77 = arith.constant 0.000000e+00 : f32
    %438 = arith.subf %cst_77, %437 : f32
    %cst_78 = arith.constant 4.000000e+00 : f32
    %439 = arith.divf %438, %cst_78 : f32
    %c0_79 = arith.constant 0 : index
    %c0_80 = arith.constant 0 : index
    %440 = memref.load %arg11[%c0_79, %c0_80] : memref<1x1xf32, #tpu.memory_space<smem>>
    memref.store %439, %arg11[%c0_79, %c0_80] : memref<1x1xf32, #tpu.memory_space<smem>>
    return
  }
}

</mosaic_0001>

<llo_original>
// kernel: encoder_decoder_loss.1
$region0: #{encoder_decoder_loss.1}
  #allocation0 [shape = 'u32[]', space=smem, size = 0x4, offset = 0x4, fixed_abs, tag = 'smem constant byte address 0x4 - core index']
  #allocation1 [shape = 'u32[144,128]{1,0:T(1,128)}', space=vmem, size = 0x12000, scoped, tag = 'internal scratch']
  %s0 = inlined_call_operand.vmem [shape: bf16[64,16], index: 0, kind: input, shape index: {}]
  %s1 = inlined_call_operand.vmem [shape: bf16[8,16], index: 1, kind: input, shape index: {}]
  %s2 = inlined_call_operand.vmem [shape: s32[8,8], index: 2, kind: input, shape index: {}]
  %s3 = inlined_call_operand.vmem [shape: bf16[16,96], index: 3, kind: input, shape index: {}]
  %s4 = inlined_call_operand.vmem [shape: bf16[32,96], index: 4, kind: input, shape index: {}]
  %s5 = inlined_call_operand.vmem [shape: bf16[32,32], index: 5, kind: input, shape index: {}]
  %s6 = inlined_call_operand.vmem [shape: bf16[32,32], index: 6, kind: input, shape index: {}]
  %s7 = inlined_call_operand.vmem [shape: bf16[16,96], index: 7, kind: input, shape index: {}]
  %s8 = inlined_call_operand.vmem [shape: bf16[32,96], index: 8, kind: input, shape index: {}]
  %s9 = inlined_call_operand.vmem [shape: bf16[32,32], index: 9, kind: input, shape index: {}]
  %s10 = inlined_call_operand.vmem [shape: f32[8,96], index: 10, kind: input, shape index: {}]
  %s11 = inlined_call_operand.hbm [shape: f32[1,1], index: 11, kind: output, shape index: {}]
  %s12 = sld [smem:[#allocation0]]
  $region54: #{encoder_decoder_loss.1} parent=0
    _
  %s14 = ssub.s32 1, %s12
  %s15 = scalar_select 0, %s14, %s12
  $region1: #{encoder_decoder_loss.1} parent=0
    #allocation2 [shape = 'u8[512]{0}', space=smem, size = 0x200, scoped, tag = 'output window, operand 0, single buffered']
    #allocation3 [shape = 's32[1]{0}', space=sflag, size = 0x4, scoped, tag = 'scoped memory for encoder_decoder_loss.1']
    %16 = vsyncpa [#allocation3], 0
    // Predicated region
    $region2: #{encoder_decoder_loss.1} parent=1 // pred_check
      _
    $region3: #{encoder_decoder_loss.1} parent=1 // pred_check_branch
      %18 = sbr.rel (0) target = $region5
    $region4: #{encoder_decoder_loss.1} parent=1 // pred_region
      _
    $region5: #{encoder_decoder_loss.1} parent=1 // pred_fallthru
      _
    // Predicated region
    $region6: #{encoder_decoder_loss.1} parent=1 // pred_check
      _
    $region7: #{encoder_decoder_loss.1} parent=1 // pred_check_branch
      %20 = sbr.rel (0) target = $region9
    $region8: #{encoder_decoder_loss.1} parent=1 // pred_region
      _
    $region9: #{encoder_decoder_loss.1} parent=1 // pred_fallthru
      _
    // Predicated region
    $region10: #{encoder_decoder_loss.1} parent=1 // pred_check
      _
    $region11: #{encoder_decoder_loss.1} parent=1 // pred_check_branch
      %22 = sbr.rel (0) target = $region13
    $region12: #{encoder_decoder_loss.1} parent=1 // pred_region
      _
    $region13: #{encoder_decoder_loss.1} parent=1 // pred_fallthru
      _
    // Predicated region
    $region14: #{encoder_decoder_loss.1} parent=1 // pred_check
      _
    $region15: #{encoder_decoder_loss.1} parent=1 // pred_check_branch
      %24 = sbr.rel (0) target = $region17
    $region16: #{encoder_decoder_loss.1} parent=1 // pred_region
      _
    $region17: #{encoder_decoder_loss.1} parent=1 // pred_fallthru
      _
    // Predicated region
    $region18: #{encoder_decoder_loss.1} parent=1 // pred_check
      _
    $region19: #{encoder_decoder_loss.1} parent=1 // pred_check_branch
      %26 = sbr.rel (0) target = $region21
    $region20: #{encoder_decoder_loss.1} parent=1 // pred_region
      _
    $region21: #{encoder_decoder_loss.1} parent=1 // pred_fallthru
      _
    // Predicated region
    $region22: #{encoder_decoder_loss.1} parent=1 // pred_check
      _
    $region23: #{encoder_decoder_loss.1} parent=1 // pred_check_branch
      %28 = sbr.rel (0) target = $region25
    $region24: #{encoder_decoder_loss.1} parent=1 // pred_region
      _
    $region25: #{encoder_decoder_loss.1} parent=1 // pred_fallthru
      _
    // Predicated region
    $region26: #{encoder_decoder_loss.1} parent=1 // pred_check
      _
    $region27: #{encoder_decoder_loss.1} parent=1 // pred_check_branch
      %30 = sbr.rel (0) target = $region29
    $region28: #{encoder_decoder_loss.1} parent=1 // pred_region
      _
    $region29: #{encoder_decoder_loss.1} parent=1 // pred_fallthru
      _
    // Predicated region
    $region30: #{encoder_decoder_loss.1} parent=1 // pred_check
      _
    $region31: #{encoder_decoder_loss.1} parent=1 // pred_check_branch
      %32 = sbr.rel (0) target = $region33
    $region32: #{encoder_decoder_loss.1} parent=1 // pred_region
      _
    $region33: #{encoder_decoder_loss.1} parent=1 // pred_fallthru
      _
    // Predicated region
    $region34: #{encoder_decoder_loss.1} parent=1 // pred_check
      _
    $region35: #{encoder_decoder_loss.1} parent=1 // pred_check_branch
      %34 = sbr.rel (0) target = $region37
    $region36: #{encoder_decoder_loss.1} parent=1 // pred_region
      _
    $region37: #{encoder_decoder_loss.1} parent=1 // pred_fallthru
      _
    // Predicated region
    $region38: #{encoder_decoder_loss.1} parent=1 // pred_check
      _
    $region39: #{encoder_decoder_loss.1} parent=1 // pred_check_branch
      %36 = sbr.rel (0) target = $region41
    $region40: #{encoder_decoder_loss.1} parent=1 // pred_region
      _
    $region41: #{encoder_decoder_loss.1} parent=1 // pred_fallthru
      _
    // Predicated region
    $region42: #{encoder_decoder_loss.1} parent=1 // pred_check
      _
    $region43: #{encoder_decoder_loss.1} parent=1 // pred_check_branch
      %38 = sbr.rel (0) target = $region45
    $region44: #{encoder_decoder_loss.1} parent=1 // pred_region
      _
    $region45: #{encoder_decoder_loss.1} parent=1 // pred_fallthru
      _
    %v40 = vld [vmem:[%s10] sm:$0xff]
    %v41 = vld [vmem:[%s0] sm:$0xf]
    %v42 = vld [vmem:[%s0 + $0x4] sm:$0xf]
    %v43 = vld [vmem:[%s0 + $0x8] sm:$0xf]
    %v44 = vld [vmem:[%s0 + $0xc] sm:$0xf]
    %v45 = vld [vmem:[%s0 + $0x10] sm:$0xf]
    %v46 = vld [vmem:[%s0 + $0x14] sm:$0xf]
    %v47 = vld [vmem:[%s0 + $0x18] sm:$0xf]
    %v48 = vld [vmem:[%s0 + $0x1c] sm:$0xf]
    %v49 = vld [vmem:[%s3] sm:$0xf]
    %v50 = vld [vmem:[%s3 + $0x4] sm:$0xf]
    %v51 = vlaneseq
    %v52 = vshrl.u32 %v51, 7
    %v53 = vsub.s32 0, %v52
    %v54 = vrot.slane %v40, %v53
    %v63 = vunpack.c.l.b16 %v41
    %v64 = vunpack.c.l.b16 %v42
    %v65 = vunpack.c.l.b16 %v43
    %v66 = vunpack.c.l.b16 %v44
    %v67 = vunpack.c.l.b16 %v45
    %v68 = vunpack.c.l.b16 %v46
    %v69 = vunpack.c.l.b16 %v47
    %v70 = vunpack.c.l.b16 %v48
    %v71 = vpack.c.b16 %v64, %v63
    %v72 = vpack.c.b16 %v66, %v65
    %v73 = vpack.c.b16 %v68, %v67
    %v74 = vpack.c.b16 %v70, %v69
    %v77 = vunpack.c.l.b16 %v49
    %v78 = vunpack.c.l.b16 %v50
    %v79 = vpack.c.b16 %v78, %v77
    %vm81 = vcmask 130048
    %v83 = vsel %vm81, %v71, 0
    %v86 = vsel %vm81, %v72, 0
    %v89 = vsel %vm81, %v73, 0
    %v92 = vsel %vm81, %v74, 0
    %94 = vmatprep.subr.bf16.mxu0 0
    %95 = vmatpush1.bf16.msra.mxu0 %v79
    %96 = vmatprep.subr.bf16.mxu0 0
    %97 = vmatpush1.bf16.msra.mxu0 0
    %98 = vmatprep.subr.bf16.mxu0 0
    %99 = vmatpush1.bf16.msra.mxu0 0
    %100 = vmatprep.subr.bf16.mxu0 0
    %101 = vmatpush1.bf16.msra.mxu0 0
    %102 = vmatprep.subr.bf16.mxu0 0
    %103 = vmatpush1.bf16.msra.mxu0 0
    %104 = vmatprep.subr.bf16.mxu0 0
    %105 = vmatpush1.bf16.msra.mxu0 0
    %106 = vmatprep.subr.bf16.mxu0 0
    %107 = vmatpush1.bf16.msra.mxu0 0
    %108 = vmatprep.subr.bf16.mxu0 0
    %109 = vmatpush1.bf16.msra.mxu0 0
    %110 = vmatprep.subr.bf16.mxu0 0
    %111 = vmatpush1.bf16.msra.mxu0 0
    %112 = vmatprep.subr.bf16.mxu0 0
    %113 = vmatpush1.bf16.msra.mxu0 0
    %114 = vmatprep.subr.bf16.mxu0 0
    %115 = vmatpush1.bf16.msra.mxu0 0
    %116 = vmatprep.subr.bf16.mxu0 0
    %117 = vmatpush1.bf16.msra.mxu0 0
    %118 = vmatprep.subr.bf16.mxu0 0
    %119 = vmatpush1.bf16.msra.mxu0 0
    %120 = vmatprep.subr.bf16.mxu0 0
    %121 = vmatpush1.bf16.msra.mxu0 0
    %122 = vmatprep.subr.bf16.mxu0 0
    %123 = vmatpush1.bf16.msra.mxu0 0
    %124 = vmatprep.subr.bf16.mxu0 0
    %125 = vmatpush1.bf16.msra.mxu0 0
    %126 = vmatprep.mubr.bf16.mxu0 0
    %127 = vmatmul.mubr.bf16.gmra.mrb[0].mxu0 %v83
    %v128 = vpop.f32.mrb[0].mxu0
    %v129 = vadd.f32 %v54, %v128
    %v130 = vpop.f32.mrb[0].mxu0
    %v131 = vpop.f32.mrb[0].mxu0
    %v132 = vadd.f32 %v54, %v131
    %v133 = vpop.f32.mrb[0].mxu0
    %134 = vmatprep.mubr.bf16.mxu0 0
    %135 = vmatmul.mubr.bf16.gmra.mrb[0].mxu0 %v86
    %v136 = vpop.f32.mrb[0].mxu0
    %v137 = vadd.f32 %v54, %v136
    %v138 = vpop.f32.mrb[0].mxu0
    %v139 = vpop.f32.mrb[0].mxu0
    %v140 = vadd.f32 %v54, %v139
    %v141 = vpop.f32.mrb[0].mxu0
    %142 = vmatprep.mubr.bf16.mxu0 0
    %143 = vmatmul.mubr.bf16.gmra.mrb[0].mxu0 %v89
    %v144 = vpop.f32.mrb[0].mxu0
    %v145 = vadd.f32 %v54, %v144
    %v146 = vpop.f32.mrb[0].mxu0
    %v147 = vpop.f32.mrb[0].mxu0
    %v148 = vadd.f32 %v54, %v147
    %v149 = vpop.f32.mrb[0].mxu0
    %150 = vmatprep.mubr.bf16.mxu0 0
    %151 = vmatmul.mubr.bf16.gmra.mrb[0].mxu0 %v92
    %v152 = vpop.f32.mrb[0].mxu0
    %v153 = vadd.f32 %v54, %v152
    %v154 = vpop.f32.mrb[0].mxu0
    %v155 = vpop.f32.mrb[0].mxu0
    %v156 = vadd.f32 %v54, %v155
    %v157 = vpop.f32.mrb[0].mxu0
    %158 = vdwg.mxu0
    %v159 = vld [vmem:[%s4] sm:$0xf]
    %v160 = vld [vmem:[%s4 + $0x4] sm:$0xf]
    %v161 = vld [vmem:[%s4 + $0x8] sm:$0xf]
    %v162 = vld [vmem:[%s4 + $0xc] sm:$0xf]
    %v163 = vlaneseq
    %v164 = vshrl.u32 %v163, 7
    %v165 = vsub.s32 1, %v164
    %v166 = vrot.slane %v40, %v165
    %v167 = vadd.f32 %v129, %v166
    %v168 = vxor.u32 %v167, 2147483648
    %v169 = vmul.f32 %v168, 1.442695
    %v170 = vpow.pop %v169
    %v171 = vadd.f32 %v170, 1.0
    %v172 = vrcp.pop %v171
    %v173 = vmul.f32 1.0, %v172
    %175 = vrot.lane.b32.xlu0 %v166, 64
    %v176 = vpop.permute.xlu0 %175
    %v178 = vmul.f32 %v173, %v176
    %180 = vrot.lane.b32.xlu0 %v178, 64
    %v181 = vpop.permute.xlu0 %180
    %v183 = vadd.f32 %v129, %v181
    %v184 = vtanh.pop %v183
    %v185 = vsub.f32 1.0, %v173
    %187 = vrot.lane.b32.xlu0 %v184, 96
    %v188 = vpop.permute.xlu0 %187
    %v190 = vmul.f32 %v185, %v188
    %v191 = vpack.c.bf16 %v190, %v190
    %193 = vrot.lane.b32.xlu0 %v191, 96
    %v194 = vpop.permute.xlu0 %193
    %v199 = vunpack.c.l.b16 %v159
    %v200 = vunpack.c.l.b16 %v160
    %v201 = vunpack.c.l.b16 %v161
    %v202 = vunpack.c.l.b16 %v162
    %v203 = vpack.c.b16 %v200, %v199
    %v204 = vpack.c.b16 %v202, %v201
    %vm207 = vcmask 261120
    %v209 = vsel %vm207, %v194, 0
    %211 = vmatprep.subr.bf16.mxu0 0
    %212 = vmatpush1.bf16.msra.mxu0 %v203
    %213 = vmatprep.subr.bf16.mxu0 0
    %214 = vmatpush1.bf16.msra.mxu0 %v204
    %215 = vmatprep.subr.bf16.mxu0 0
    %216 = vmatpush1.bf16.msra.mxu0 0
    %217 = vmatprep.subr.bf16.mxu0 0
    %218 = vmatpush1.bf16.msra.mxu0 0
    %219 = vmatprep.subr.bf16.mxu0 0
    %220 = vmatpush1.bf16.msra.mxu0 0
    %221 = vmatprep.subr.bf16.mxu0 0
    %222 = vmatpush1.bf16.msra.mxu0 0
    %223 = vmatprep.subr.bf16.mxu0 0
    %224 = vmatpush1.bf16.msra.mxu0 0
    %225 = vmatprep.subr.bf16.mxu0 0
    %226 = vmatpush1.bf16.msra.mxu0 0
    %227 = vmatprep.subr.bf16.mxu0 0
    %228 = vmatpush1.bf16.msra.mxu0 0
    %229 = vmatprep.subr.bf16.mxu0 0
    %230 = vmatpush1.bf16.msra.mxu0 0
    %231 = vmatprep.subr.bf16.mxu0 0
    %232 = vmatpush1.bf16.msra.mxu0 0
    %233 = vmatprep.subr.bf16.mxu0 0
    %234 = vmatpush1.bf16.msra.mxu0 0
    %235 = vmatprep.subr.bf16.mxu0 0
    %236 = vmatpush1.bf16.msra.mxu0 0
    %237 = vmatprep.subr.bf16.mxu0 0
    %238 = vmatpush1.bf16.msra.mxu0 0
    %239 = vmatprep.subr.bf16.mxu0 0
    %240 = vmatpush1.bf16.msra.mxu0 0
    %241 = vmatprep.subr.bf16.mxu0 0
    %242 = vmatpush1.bf16.msra.mxu0 0
    %243 = vmatprep.mubr.bf16.mxu0 0
    %244 = vmatmul.mubr.bf16.gmra.mrb[0].mxu0 %v209
    %v245 = vpop.f32.mrb[0].mxu0
    %v246 = vadd.f32 %v166, %v245
    %v247 = vpop.f32.mrb[0].mxu0
    %v248 = vpop.f32.mrb[0].mxu0
    %v249 = vpop.f32.mrb[0].mxu0
    %250 = vdwg.mxu0
    %v251 = vadd.f32 %v132, %v246
    %v252 = vxor.u32 %v251, 2147483648
    %v253 = vmul.f32 %v252, 1.442695
    %v254 = vpow.pop %v253
    %v255 = vadd.f32 %v254, 1.0
    %v256 = vrcp.pop %v255
    %v257 = vmul.f32 1.0, %v256
    %259 = vrot.lane.b32.xlu0 %v246, 64
    %v260 = vpop.permute.xlu0 %259
    %v262 = vmul.f32 %v257, %v260
    %264 = vrot.lane.b32.xlu0 %v262, 64
    %v265 = vpop.permute.xlu0 %264
    %v267 = vadd.f32 %v132, %v265
    %v268 = vtanh.pop %v267
    %v269 = vsub.f32 1.0, %v257
    %271 = vrot.lane.b32.xlu0 %v268, 96
    %v272 = vpop.permute.xlu0 %271
    %v274 = vmul.f32 %v269, %v272
    %v275 = vmul.f32 %v257, %v190
    %v276 = vadd.f32 %v274, %v275
    %v277 = vpack.c.bf16 %v276, %v276
    %279 = vrot.lane.b32.xlu0 %v277, 96
    %v280 = vpop.permute.xlu0 %279
    %v282 = vsel %vm207, %v280, 0
    %284 = vmatprep.subr.bf16.mxu0 0
    %285 = vmatpush1.bf16.msra.mxu0 %v203
    %286 = vmatprep.subr.bf16.mxu0 0
    %287 = vmatpush1.bf16.msra.mxu0 %v204
    %288 = vmatprep.subr.bf16.mxu0 0
    %289 = vmatpush1.bf16.msra.mxu0 0
    %290 = vmatprep.subr.bf16.mxu0 0
    %291 = vmatpush1.bf16.msra.mxu0 0
    %292 = vmatprep.subr.bf16.mxu0 0
    %293 = vmatpush1.bf16.msra.mxu0 0
    %294 = vmatprep.subr.bf16.mxu0 0
    %295 = vmatpush1.bf16.msra.mxu0 0
    %296 = vmatprep.subr.bf16.mxu0 0
    %297 = vmatpush1.bf16.msra.mxu0 0
    %298 = vmatprep.subr.bf16.mxu0 0
    %299 = vmatpush1.bf16.msra.mxu0 0
    %300 = vmatprep.subr.bf16.mxu0 0
    %301 = vmatpush1.bf16.msra.mxu0 0
    %302 = vmatprep.subr.bf16.mxu0 0
    %303 = vmatpush1.bf16.msra.mxu0 0
    %304 = vmatprep.subr.bf16.mxu0 0
    %305 = vmatpush1.bf16.msra.mxu0 0
    %306 = vmatprep.subr.bf16.mxu0 0
    %307 = vmatpush1.bf16.msra.mxu0 0
    %308 = vmatprep.subr.bf16.mxu0 0
    %309 = vmatpush1.bf16.msra.mxu0 0
    %310 = vmatprep.subr.bf16.mxu0 0
    %311 = vmatpush1.bf16.msra.mxu0 0
    %312 = vmatprep.subr.bf16.mxu0 0
    %313 = vmatpush1.bf16.msra.mxu0 0
    %314 = vmatprep.subr.bf16.mxu0 0
    %315 = vmatpush1.bf16.msra.mxu0 0
    %316 = vmatprep.mubr.bf16.mxu0 0
    %317 = vmatmul.mubr.bf16.gmra.mrb[0].mxu0 %v282
    %v318 = vpop.f32.mrb[0].mxu0
    %v319 = vadd.f32 %v166, %v318
    %v320 = vpop.f32.mrb[0].mxu0
    %v321 = vpop.f32.mrb[0].mxu0
    %v322 = vpop.f32.mrb[0].mxu0
    %323 = vdwg.mxu0
    %v324 = vadd.f32 %v137, %v319
    %v325 = vxor.u32 %v324, 2147483648
    %v326 = vmul.f32 %v325, 1.442695
    %v327 = vpow.pop %v326
    %v328 = vadd.f32 %v327, 1.0
    %v329 = vrcp.pop %v328
    %v330 = vmul.f32 1.0, %v329
    %332 = vrot.lane.b32.xlu0 %v319, 64
    %v333 = vpop.permute.xlu0 %332
    %v335 = vmul.f32 %v330, %v333
    %337 = vrot.lane.b32.xlu0 %v335, 64
    %v338 = vpop.permute.xlu0 %337
    %v340 = vadd.f32 %v137, %v338
    %v341 = vtanh.pop %v340
    %v342 = vsub.f32 1.0, %v330
    %344 = vrot.lane.b32.xlu0 %v341, 96
    %v345 = vpop.permute.xlu0 %344
    %v347 = vmul.f32 %v342, %v345
    %v348 = vmul.f32 %v330, %v276
    %v349 = vadd.f32 %v347, %v348
    %v350 = vpack.c.bf16 %v349, %v349
    %352 = vrot.lane.b32.xlu0 %v350, 96
    %v353 = vpop.permute.xlu0 %352
    %v355 = vsel %vm207, %v353, 0
    %357 = vmatprep.subr.bf16.mxu0 0
    %358 = vmatpush1.bf16.msra.mxu0 %v203
    %359 = vmatprep.subr.bf16.mxu0 0
    %360 = vmatpush1.bf16.msra.mxu0 %v204
    %361 = vmatprep.subr.bf16.mxu0 0
    %362 = vmatpush1.bf16.msra.mxu0 0
    %363 = vmatprep.subr.bf16.mxu0 0
    %364 = vmatpush1.bf16.msra.mxu0 0
    %365 = vmatprep.subr.bf16.mxu0 0
    %366 = vmatpush1.bf16.msra.mxu0 0
    %367 = vmatprep.subr.bf16.mxu0 0
    %368 = vmatpush1.bf16.msra.mxu0 0
    %369 = vmatprep.subr.bf16.mxu0 0
    %370 = vmatpush1.bf16.msra.mxu0 0
    %371 = vmatprep.subr.bf16.mxu0 0
    %372 = vmatpush1.bf16.msra.mxu0 0
    %373 = vmatprep.subr.bf16.mxu0 0
    %374 = vmatpush1.bf16.msra.mxu0 0
    %375 = vmatprep.subr.bf16.mxu0 0
    %376 = vmatpush1.bf16.msra.mxu0 0
    %377 = vmatprep.subr.bf16.mxu0 0
    %378 = vmatpush1.bf16.msra.mxu0 0
    %379 = vmatprep.subr.bf16.mxu0 0
    %380 = vmatpush1.bf16.msra.mxu0 0
    %381 = vmatprep.subr.bf16.mxu0 0
    %382 = vmatpush1.bf16.msra.mxu0 0
    %383 = vmatprep.subr.bf16.mxu0 0
    %384 = vmatpush1.bf16.msra.mxu0 0
    %385 = vmatprep.subr.bf16.mxu0 0
    %386 = vmatpush1.bf16.msra.mxu0 0
    %387 = vmatprep.subr.bf16.mxu0 0
    %388 = vmatpush1.bf16.msra.mxu0 0
    %389 = vmatprep.mubr.bf16.mxu0 0
    %390 = vmatmul.mubr.bf16.gmra.mrb[0].mxu0 %v355
    %v391 = vpop.f32.mrb[0].mxu0
    %v392 = vadd.f32 %v166, %v391
    %v393 = vpop.f32.mrb[0].mxu0
    %v394 = vpop.f32.mrb[0].mxu0
    %v395 = vpop.f32.mrb[0].mxu0
    %396 = vdwg.mxu0
    %v397 = vadd.f32 %v140, %v392
    %v398 = vxor.u32 %v397, 2147483648
    %v399 = vmul.f32 %v398, 1.442695
    %v400 = vpow.pop %v399
    %v401 = vadd.f32 %v400, 1.0
    %v402 = vrcp.pop %v401
    %v403 = vmul.f32 1.0, %v402
    %405 = vrot.lane.b32.xlu0 %v392, 64
    %v406 = vpop.permute.xlu0 %405
    %v408 = vmul.f32 %v403, %v406
    %410 = vrot.lane.b32.xlu0 %v408, 64
    %v411 = vpop.permute.xlu0 %410
    %v413 = vadd.f32 %v140, %v411
    %v414 = vtanh.pop %v413
    %v415 = vsub.f32 1.0, %v403
    %417 = vrot.lane.b32.xlu0 %v414, 96
    %v418 = vpop.permute.xlu0 %417
    %v420 = vmul.f32 %v415, %v418
    %v421 = vmul.f32 %v403, %v349
    %v422 = vadd.f32 %v420, %v421
    %v423 = vpack.c.bf16 %v422, %v422
    %425 = vrot.lane.b32.xlu0 %v423, 96
    %v426 = vpop.permute.xlu0 %425
    %v428 = vsel %vm207, %v426, 0
    %430 = vmatprep.subr.bf16.mxu0 0
    %431 = vmatpush1.bf16.msra.mxu0 %v203
    %432 = vmatprep.subr.bf16.mxu0 0
    %433 = vmatpush1.bf16.msra.mxu0 %v204
    %434 = vmatprep.subr.bf16.mxu0 0
    %435 = vmatpush1.bf16.msra.mxu0 0
    %436 = vmatprep.subr.bf16.mxu0 0
    %437 = vmatpush1.bf16.msra.mxu0 0
    %438 = vmatprep.subr.bf16.mxu0 0
    %439 = vmatpush1.bf16.msra.mxu0 0
    %440 = vmatprep.subr.bf16.mxu0 0
    %441 = vmatpush1.bf16.msra.mxu0 0
    %442 = vmatprep.subr.bf16.mxu0 0
    %443 = vmatpush1.bf16.msra.mxu0 0
    %444 = vmatprep.subr.bf16.mxu0 0
    %445 = vmatpush1.bf16.msra.mxu0 0
    %446 = vmatprep.subr.bf16.mxu0 0
    %447 = vmatpush1.bf16.msra.mxu0 0
    %448 = vmatprep.subr.bf16.mxu0 0
    %449 = vmatpush1.bf16.msra.mxu0 0
    %450 = vmatprep.subr.bf16.mxu0 0
    %451 = vmatpush1.bf16.msra.mxu0 0
    %452 = vmatprep.subr.bf16.mxu0 0
    %453 = vmatpush1.bf16.msra.mxu0 0
    %454 = vmatprep.subr.bf16.mxu0 0
    %455 = vmatpush1.bf16.msra.mxu0 0
    %456 = vmatprep.subr.bf16.mxu0 0
    %457 = vmatpush1.bf16.msra.mxu0 0
    %458 = vmatprep.subr.bf16.mxu0 0
    %459 = vmatpush1.bf16.msra.mxu0 0
    %460 = vmatprep.subr.bf16.mxu0 0
    %461 = vmatpush1.bf16.msra.mxu0 0
    %462 = vmatprep.mubr.bf16.mxu0 0
    %463 = vmatmul.mubr.bf16.gmra.mrb[0].mxu0 %v428
    %v464 = vpop.f32.mrb[0].mxu0
    %v465 = vadd.f32 %v166, %v464
    %v466 = vpop.f32.mrb[0].mxu0
    %v467 = vpop.f32.mrb[0].mxu0
    %v468 = vpop.f32.mrb[0].mxu0
    %469 = vdwg.mxu0
    %v470 = vadd.f32 %v145, %v465
    %v471 = vxor.u32 %v470, 2147483648
    %v472 = vmul.f32 %v471, 1.442695
    %v473 = vpow.pop %v472
    %v474 = vadd.f32 %v473, 1.0
    %v475 = vrcp.pop %v474
    %v476 = vmul.f32 1.0, %v475
    %478 = vrot.lane.b32.xlu0 %v465, 64
    %v479 = vpop.permute.xlu0 %478
    %v481 = vmul.f32 %v476, %v479
    %483 = vrot.lane.b32.xlu0 %v481, 64
    %v484 = vpop.permute.xlu0 %483
    %v486 = vadd.f32 %v145, %v484
    %v487 = vtanh.pop %v486
    %v488 = vsub.f32 1.0, %v476
    %490 = vrot.lane.b32.xlu0 %v487, 96
    %v491 = vpop.permute.xlu0 %490
    %v493 = vmul.f32 %v488, %v491
    %v494 = vmul.f32 %v476, %v422
    %v495 = vadd.f32 %v493, %v494
    %v496 = vpack.c.bf16 %v495, %v495
    %498 = vrot.lane.b32.xlu0 %v496, 96
    %v499 = vpop.permute.xlu0 %498
    %v501 = vsel %vm207, %v499, 0
    %503 = vmatprep.subr.bf16.mxu0 0
    %504 = vmatpush1.bf16.msra.mxu0 %v203
    %505 = vmatprep.subr.bf16.mxu0 0
    %506 = vmatpush1.bf16.msra.mxu0 %v204
    %507 = vmatprep.subr.bf16.mxu0 0
    %508 = vmatpush1.bf16.msra.mxu0 0
    %509 = vmatprep.subr.bf16.mxu0 0
    %510 = vmatpush1.bf16.msra.mxu0 0
    %511 = vmatprep.subr.bf16.mxu0 0
    %512 = vmatpush1.bf16.msra.mxu0 0
    %513 = vmatprep.subr.bf16.mxu0 0
    %514 = vmatpush1.bf16.msra.mxu0 0
    %515 = vmatprep.subr.bf16.mxu0 0
    %516 = vmatpush1.bf16.msra.mxu0 0
    %517 = vmatprep.subr.bf16.mxu0 0
    %518 = vmatpush1.bf16.msra.mxu0 0
    %519 = vmatprep.subr.bf16.mxu0 0
    %520 = vmatpush1.bf16.msra.mxu0 0
    %521 = vmatprep.subr.bf16.mxu0 0
    %522 = vmatpush1.bf16.msra.mxu0 0
    %523 = vmatprep.subr.bf16.mxu0 0
    %524 = vmatpush1.bf16.msra.mxu0 0
    %525 = vmatprep.subr.bf16.mxu0 0
    %526 = vmatpush1.bf16.msra.mxu0 0
    %527 = vmatprep.subr.bf16.mxu0 0
    %528 = vmatpush1.bf16.msra.mxu0 0
    %529 = vmatprep.subr.bf16.mxu0 0
    %530 = vmatpush1.bf16.msra.mxu0 0
    %531 = vmatprep.subr.bf16.mxu0 0
    %532 = vmatpush1.bf16.msra.mxu0 0
    %533 = vmatprep.subr.bf16.mxu0 0
    %534 = vmatpush1.bf16.msra.mxu0 0
    %535 = vmatprep.mubr.bf16.mxu0 0
    %536 = vmatmul.mubr.bf16.gmra.mrb[0].mxu0 %v501
    %v537 = vpop.f32.mrb[0].mxu0
    %v538 = vadd.f32 %v166, %v537
    %v539 = vpop.f32.mrb[0].mxu0
    %v540 = vpop.f32.mrb[0].mxu0
    %v541 = vpop.f32.mrb[0].mxu0
    %542 = vdwg.mxu0
    %v543 = vadd.f32 %v148, %v538
    %v544 = vxor.u32 %v543, 2147483648
    %v545 = vmul.f32 %v544, 1.442695
    %v546 = vpow.pop %v545
    %v547 = vadd.f32 %v546, 1.0
    %v548 = vrcp.pop %v547
    %v549 = vmul.f32 1.0, %v548
    %551 = vrot.lane.b32.xlu0 %v538, 64
    %v552 = vpop.permute.xlu0 %551
    %v554 = vmul.f32 %v549, %v552
    %556 = vrot.lane.b32.xlu0 %v554, 64
    %v557 = vpop.permute.xlu0 %556
    %v559 = vadd.f32 %v148, %v557
    %v560 = vtanh.pop %v559
    %v561 = vsub.f32 1.0, %v549
    %563 = vrot.lane.b32.xlu0 %v560, 96
    %v564 = vpop.permute.xlu0 %563
    %v566 = vmul.f32 %v561, %v564
    %v567 = vmul.f32 %v549, %v495
    %v568 = vadd.f32 %v566, %v567
    %v569 = vpack.c.bf16 %v568, %v568
    %571 = vrot.lane.b32.xlu0 %v569, 96
    %v572 = vpop.permute.xlu0 %571
    %v574 = vsel %vm207, %v572, 0
    %576 = vmatprep.subr.bf16.mxu0 0
    %577 = vmatpush1.bf16.msra.mxu0 %v203
    %578 = vmatprep.subr.bf16.mxu0 0
    %579 = vmatpush1.bf16.msra.mxu0 %v204
    %580 = vmatprep.subr.bf16.mxu0 0
    %581 = vmatpush1.bf16.msra.mxu0 0
    %582 = vmatprep.subr.bf16.mxu0 0
    %583 = vmatpush1.bf16.msra.mxu0 0
    %584 = vmatprep.subr.bf16.mxu0 0
    %585 = vmatpush1.bf16.msra.mxu0 0
    %586 = vmatprep.subr.bf16.mxu0 0
    %587 = vmatpush1.bf16.msra.mxu0 0
    %588 = vmatprep.subr.bf16.mxu0 0
    %589 = vmatpush1.bf16.msra.mxu0 0
    %590 = vmatprep.subr.bf16.mxu0 0
    %591 = vmatpush1.bf16.msra.mxu0 0
    %592 = vmatprep.subr.bf16.mxu0 0
    %593 = vmatpush1.bf16.msra.mxu0 0
    %594 = vmatprep.subr.bf16.mxu0 0
    %595 = vmatpush1.bf16.msra.mxu0 0
    %596 = vmatprep.subr.bf16.mxu0 0
    %597 = vmatpush1.bf16.msra.mxu0 0
    %598 = vmatprep.subr.bf16.mxu0 0
    %599 = vmatpush1.bf16.msra.mxu0 0
    %600 = vmatprep.subr.bf16.mxu0 0
    %601 = vmatpush1.bf16.msra.mxu0 0
    %602 = vmatprep.subr.bf16.mxu0 0
    %603 = vmatpush1.bf16.msra.mxu0 0
    %604 = vmatprep.subr.bf16.mxu0 0
    %605 = vmatpush1.bf16.msra.mxu0 0
    %606 = vmatprep.subr.bf16.mxu0 0
    %607 = vmatpush1.bf16.msra.mxu0 0
    %608 = vmatprep.mubr.bf16.mxu0 0
    %609 = vmatmul.mubr.bf16.gmra.mrb[0].mxu0 %v574
    %v610 = vpop.f32.mrb[0].mxu0
    %v611 = vadd.f32 %v166, %v610
    %v612 = vpop.f32.mrb[0].mxu0
    %v613 = vpop.f32.mrb[0].mxu0
    %v614 = vpop.f32.mrb[0].mxu0
    %615 = vdwg.mxu0
    %v616 = vadd.f32 %v153, %v611
    %v617 = vxor.u32 %v616, 2147483648
    %v618 = vmul.f32 %v617, 1.442695
    %v619 = vpow.pop %v618
    %v620 = vadd.f32 %v619, 1.0
    %v621 = vrcp.pop %v620
    %v622 = vmul.f32 1.0, %v621
    %624 = vrot.lane.b32.xlu0 %v611, 64
    %v625 = vpop.permute.xlu0 %624
    %v627 = vmul.f32 %v622, %v625
    %629 = vrot.lane.b32.xlu0 %v627, 64
    %v630 = vpop.permute.xlu0 %629
    %v632 = vadd.f32 %v153, %v630
    %v633 = vtanh.pop %v632
    %v634 = vsub.f32 1.0, %v622
    %636 = vrot.lane.b32.xlu0 %v633, 96
    %v637 = vpop.permute.xlu0 %636
    %v639 = vmul.f32 %v634, %v637
    %v640 = vmul.f32 %v622, %v568
    %v641 = vadd.f32 %v639, %v640
    %v642 = vpack.c.bf16 %v641, %v641
    %644 = vrot.lane.b32.xlu0 %v642, 96
    %v645 = vpop.permute.xlu0 %644
    %v647 = vsel %vm207, %v645, 0
    %649 = vmatprep.subr.bf16.mxu0 0
    %650 = vmatpush1.bf16.msra.mxu0 %v203
    %651 = vmatprep.subr.bf16.mxu0 0
    %652 = vmatpush1.bf16.msra.mxu0 %v204
    %653 = vmatprep.subr.bf16.mxu0 0
    %654 = vmatpush1.bf16.msra.mxu0 0
    %655 = vmatprep.subr.bf16.mxu0 0
    %656 = vmatpush1.bf16.msra.mxu0 0
    %657 = vmatprep.subr.bf16.mxu0 0
    %658 = vmatpush1.bf16.msra.mxu0 0
    %659 = vmatprep.subr.bf16.mxu0 0
    %660 = vmatpush1.bf16.msra.mxu0 0
    %661 = vmatprep.subr.bf16.mxu0 0
    %662 = vmatpush1.bf16.msra.mxu0 0
    %663 = vmatprep.subr.bf16.mxu0 0
    %664 = vmatpush1.bf16.msra.mxu0 0
    %665 = vmatprep.subr.bf16.mxu0 0
    %666 = vmatpush1.bf16.msra.mxu0 0
    %667 = vmatprep.subr.bf16.mxu0 0
    %668 = vmatpush1.bf16.msra.mxu0 0
    %669 = vmatprep.subr.bf16.mxu0 0
    %670 = vmatpush1.bf16.msra.mxu0 0
    %671 = vmatprep.subr.bf16.mxu0 0
    %672 = vmatpush1.bf16.msra.mxu0 0
    %673 = vmatprep.subr.bf16.mxu0 0
    %674 = vmatpush1.bf16.msra.mxu0 0
    %675 = vmatprep.subr.bf16.mxu0 0
    %676 = vmatpush1.bf16.msra.mxu0 0
    %677 = vmatprep.subr.bf16.mxu0 0
    %678 = vmatpush1.bf16.msra.mxu0 0
    %679 = vmatprep.subr.bf16.mxu0 0
    %680 = vmatpush1.bf16.msra.mxu0 0
    %681 = vmatprep.mubr.bf16.mxu0 0
    %682 = vmatmul.mubr.bf16.gmra.mrb[0].mxu0 %v647
    %v683 = vpop.f32.mrb[0].mxu0
    %v684 = vadd.f32 %v166, %v683
    %v685 = vpop.f32.mrb[0].mxu0
    %v686 = vpop.f32.mrb[0].mxu0
    %v687 = vpop.f32.mrb[0].mxu0
    %688 = vdwg.mxu0
    %v689 = vadd.f32 %v156, %v684
    %v690 = vxor.u32 %v689, 2147483648
    %v691 = vmul.f32 %v690, 1.442695
    %v692 = vpow.pop %v691
    %v693 = vadd.f32 %v692, 1.0
    %v694 = vrcp.pop %v693
    %v695 = vmul.f32 1.0, %v694
    %697 = vrot.lane.b32.xlu0 %v684, 64
    %v698 = vpop.permute.xlu0 %697
    %v700 = vmul.f32 %v695, %v698
    %702 = vrot.lane.b32.xlu0 %v700, 64
    %v703 = vpop.permute.xlu0 %702
    %v705 = vadd.f32 %v156, %v703
    %v706 = vtanh.pop %v705
    %v707 = vsub.f32 1.0, %v695
    %709 = vrot.lane.b32.xlu0 %v706, 96
    %v710 = vpop.permute.xlu0 %709
    %v712 = vmul.f32 %v707, %v710
    %v713 = vmul.f32 %v695, %v641
    %v714 = vadd.f32 %v712, %v713
    %v715 = vpack.c.bf16 %v276, %v190
    %v716 = vpack.c.bf16 %v422, %v349
    %v717 = vpack.c.bf16 %v568, %v495
    %v718 = vpack.c.bf16 %v714, %v641
    %v719 = vld [vmem:[%s5] sm:$0xf]
    %v720 = vld [vmem:[%s5 + $0x4] sm:$0xf]
    %v721 = vld [vmem:[%s5 + $0x8] sm:$0xf]
    %v722 = vld [vmem:[%s5 + $0xc] sm:$0xf]
    %727 = vrot.lane.b32.xlu0 %v715, 96
    %v728 = vpop.permute.xlu0 %727
    %729 = vrot.lane.b32.xlu0 %v716, 96
    %v730 = vpop.permute.xlu0 %729
    %731 = vrot.lane.b32.xlu0 %v717, 96
    %v732 = vpop.permute.xlu0 %731
    %733 = vrot.lane.b32.xlu0 %v718, 96
    %v734 = vpop.permute.xlu0 %733
    %v739 = vunpack.c.l.b16 %v719
    %v740 = vunpack.c.l.b16 %v720
    %v741 = vunpack.c.l.b16 %v721
    %v742 = vunpack.c.l.b16 %v722
    %v743 = vpack.c.b16 %v740, %v739
    %v744 = vpack.c.b16 %v742, %v741
    %v748 = vsel %vm207, %v728, 0
    %v751 = vsel %vm207, %v730, 0
    %v754 = vsel %vm207, %v732, 0
    %v757 = vsel %vm207, %v734, 0
    %759 = vmatprep.subr.bf16.mxu0 0
    %760 = vmatpush1.bf16.msra.mxu0 %v743
    %761 = vmatprep.subr.bf16.mxu0 0
    %762 = vmatpush1.bf16.msra.mxu0 %v744
    %763 = vmatprep.subr.bf16.mxu0 0
    %764 = vmatpush1.bf16.msra.mxu0 0
    %765 = vmatprep.subr.bf16.mxu0 0
    %766 = vmatpush1.bf16.msra.mxu0 0
    %767 = vmatprep.subr.bf16.mxu0 0
    %768 = vmatpush1.bf16.msra.mxu0 0
    %769 = vmatprep.subr.bf16.mxu0 0
    %770 = vmatpush1.bf16.msra.mxu0 0
    %771 = vmatprep.subr.bf16.mxu0 0
    %772 = vmatpush1.bf16.msra.mxu0 0
    %773 = vmatprep.subr.bf16.mxu0 0
    %774 = vmatpush1.bf16.msra.mxu0 0
    %775 = vmatprep.subr.bf16.mxu0 0
    %776 = vmatpush1.bf16.msra.mxu0 0
    %777 = vmatprep.subr.bf16.mxu0 0
    %778 = vmatpush1.bf16.msra.mxu0 0
    %779 = vmatprep.subr.bf16.mxu0 0
    %780 = vmatpush1.bf16.msra.mxu0 0
    %781 = vmatprep.subr.bf16.mxu0 0
    %782 = vmatpush1.bf16.msra.mxu0 0
    %783 = vmatprep.subr.bf16.mxu0 0
    %784 = vmatpush1.bf16.msra.mxu0 0
    %785 = vmatprep.subr.bf16.mxu0 0
    %786 = vmatpush1.bf16.msra.mxu0 0
    %787 = vmatprep.subr.bf16.mxu0 0
    %788 = vmatpush1.bf16.msra.mxu0 0
    %789 = vmatprep.subr.bf16.mxu0 0
    %790 = vmatpush1.bf16.msra.mxu0 0
    %791 = vmatprep.mubr.bf16.mxu0 0
    %792 = vmatmul.mubr.bf16.gmra.mrb[0].mxu0 %v748
    %v793 = vpop.f32.mrb[0].mxu0
    %v794 = vadd.f32 0.0, %v793
    %v795 = vpop.f32.mrb[0].mxu0
    %v796 = vpop.f32.mrb[0].mxu0
    %v797 = vadd.f32 0.0, %v796
    %v798 = vpop.f32.mrb[0].mxu0
    %799 = vmatprep.mubr.bf16.mxu0 0
    %800 = vmatmul.mubr.bf16.gmra.mrb[0].mxu0 %v751
    %v801 = vpop.f32.mrb[0].mxu0
    %v802 = vadd.f32 0.0, %v801
    %v803 = vpop.f32.mrb[0].mxu0
    %v804 = vpop.f32.mrb[0].mxu0
    %v805 = vadd.f32 0.0, %v804
    %v806 = vpop.f32.mrb[0].mxu0
    %807 = vmatprep.mubr.bf16.mxu0 0
    %808 = vmatmul.mubr.bf16.gmra.mrb[0].mxu0 %v754
    %v809 = vpop.f32.mrb[0].mxu0
    %v810 = vadd.f32 0.0, %v809
    %v811 = vpop.f32.mrb[0].mxu0
    %v812 = vpop.f32.mrb[0].mxu0
    %v813 = vadd.f32 0.0, %v812
    %v814 = vpop.f32.mrb[0].mxu0
    %815 = vmatprep.mubr.bf16.mxu0 0
    %816 = vmatmul.mubr.bf16.gmra.mrb[0].mxu0 %v757
    %v817 = vpop.f32.mrb[0].mxu0
    %v818 = vadd.f32 0.0, %v817
    %v819 = vpop.f32.mrb[0].mxu0
    %v820 = vpop.f32.mrb[0].mxu0
    %v821 = vadd.f32 0.0, %v820
    %v822 = vpop.f32.mrb[0].mxu0
    %823 = vdwg.mxu0
    %v824 = vlaneseq
    %v825 = vshrl.u32 %v824, 7
    %v826 = vsub.s32 4, %v825
    %v827 = vrot.slane %v40, %v826
    %v828 = vadd.f32 %v794, %v827
    %v829 = vadd.f32 %v797, %v827
    %v830 = vadd.f32 %v802, %v827
    %v831 = vadd.f32 %v805, %v827
    %v832 = vadd.f32 %v810, %v827
    %v833 = vadd.f32 %v813, %v827
    %v834 = vadd.f32 %v818, %v827
    %v835 = vadd.f32 %v821, %v827
    %v836 = vpack.c.bf16 %v714, %v714
    %v837 = vld [vmem:[%s6] sm:$0xf]
    %v838 = vld [vmem:[%s6 + $0x4] sm:$0xf]
    %v839 = vld [vmem:[%s6 + $0x8] sm:$0xf]
    %v840 = vld [vmem:[%s6 + $0xc] sm:$0xf]
    %v841 = vlaneseq
    %v842 = vshrl.u32 %v841, 7
    %v843 = vsub.s32 5, %v842
    %v844 = vrot.slane %v40, %v843
    %846 = vrot.lane.b32.xlu0 %v836, 96
    %v847 = vpop.permute.xlu0 %846
    %v852 = vunpack.c.l.b16 %v837
    %v853 = vunpack.c.l.b16 %v838
    %v854 = vunpack.c.l.b16 %v839
    %v855 = vunpack.c.l.b16 %v840
    %v856 = vpack.c.b16 %v853, %v852
    %v857 = vpack.c.b16 %v855, %v854
    %v861 = vsel %vm207, %v847, 0
    %863 = vmatprep.subr.bf16.mxu0 0
    %864 = vmatpush1.bf16.msra.mxu0 %v856
    %865 = vmatprep.subr.bf16.mxu0 0
    %866 = vmatpush1.bf16.msra.mxu0 %v857
    %867 = vmatprep.subr.bf16.mxu0 0
    %868 = vmatpush1.bf16.msra.mxu0 0
    %869 = vmatprep.subr.bf16.mxu0 0
    %870 = vmatpush1.bf16.msra.mxu0 0
    %871 = vmatprep.subr.bf16.mxu0 0
    %872 = vmatpush1.bf16.msra.mxu0 0
    %873 = vmatprep.subr.bf16.mxu0 0
    %874 = vmatpush1.bf16.msra.mxu0 0
    %875 = vmatprep.subr.bf16.mxu0 0
    %876 = vmatpush1.bf16.msra.mxu0 0
    %877 = vmatprep.subr.bf16.mxu0 0
    %878 = vmatpush1.bf16.msra.mxu0 0
    %879 = vmatprep.subr.bf16.mxu0 0
    %880 = vmatpush1.bf16.msra.mxu0 0
    %881 = vmatprep.subr.bf16.mxu0 0
    %882 = vmatpush1.bf16.msra.mxu0 0
    %883 = vmatprep.subr.bf16.mxu0 0
    %884 = vmatpush1.bf16.msra.mxu0 0
    %885 = vmatprep.subr.bf16.mxu0 0
    %886 = vmatpush1.bf16.msra.mxu0 0
    %887 = vmatprep.subr.bf16.mxu0 0
    %888 = vmatpush1.bf16.msra.mxu0 0
    %889 = vmatprep.subr.bf16.mxu0 0
    %890 = vmatpush1.bf16.msra.mxu0 0
    %891 = vmatprep.subr.bf16.mxu0 0
    %892 = vmatpush1.bf16.msra.mxu0 0
    %893 = vmatprep.subr.bf16.mxu0 0
    %894 = vmatpush1.bf16.msra.mxu0 0
    %895 = vmatprep.mubr.bf16.mxu0 0
    %896 = vmatmul.mubr.bf16.gmra.mrb[0].mxu0 %v861
    %v897 = vpop.f32.mrb[0].mxu0
    %v898 = vadd.f32 %v844, %v897
    %v899 = vpop.f32.mrb[0].mxu0
    %v900 = vpop.f32.mrb[0].mxu0
    %v901 = vpop.f32.mrb[0].mxu0
    %902 = vdwg.mxu0
    %v903 = vadd.f32 %v828, %v898
    %v904 = vadd.f32 %v829, %v898
    %v905 = vadd.f32 %v830, %v898
    %v906 = vadd.f32 %v831, %v898
    %v907 = vadd.f32 %v832, %v898
    %v908 = vadd.f32 %v833, %v898
    %v909 = vadd.f32 %v834, %v898
    %v910 = vadd.f32 %v835, %v898
    %v911 = vtanh.pop %v903
    %v912 = vtanh.pop %v904
    %v913 = vtanh.pop %v905
    %v914 = vtanh.pop %v906
    %v915 = vtanh.pop %v907
    %v916 = vtanh.pop %v908
    %v917 = vtanh.pop %v909
    %v918 = vtanh.pop %v910
    %v919 = vlaneseq
    %v920 = vshrl.u32 %v919, 7
    %v921 = vsub.s32 6, %v920
    %v922 = vrot.slane %v40, %v921
    %v923 = vmul.f32 %v911, %v922
    %v924 = vmul.f32 %v912, %v922
    %v925 = vmul.f32 %v913, %v922
    %v926 = vmul.f32 %v914, %v922
    %v927 = vmul.f32 %v915, %v922
    %v928 = vmul.f32 %v916, %v922
    %v929 = vmul.f32 %v917, %v922
    %v930 = vmul.f32 %v918, %v922
    %v931 = vsel %vm207, %v923, 0.0
    %932 = vadd.xlane.f32.xlu0 %v931
    %v933 = vpop.xlane.xlu0 %932
    %v934 = vsel %vm207, %v924, 0.0
    %935 = vadd.xlane.f32.xlu0 %v934
    %v936 = vpop.xlane.xlu0 %935
    %v937 = vsel %vm207, %v925, 0.0
    %938 = vadd.xlane.f32.xlu0 %v937
    %v939 = vpop.xlane.xlu0 %938
    %v940 = vsel %vm207, %v926, 0.0
    %941 = vadd.xlane.f32.xlu0 %v940
    %v942 = vpop.xlane.xlu0 %941
    %v943 = vsel %vm207, %v927, 0.0
    %944 = vadd.xlane.f32.xlu0 %v943
    %v945 = vpop.xlane.xlu0 %944
    %v946 = vsel %vm207, %v928, 0.0
    %947 = vadd.xlane.f32.xlu0 %v946
    %v948 = vpop.xlane.xlu0 %947
    %v949 = vsel %vm207, %v929, 0.0
    %950 = vadd.xlane.f32.xlu0 %v949
    %v951 = vpop.xlane.xlu0 %950
    %v952 = vsel %vm207, %v930, 0.0
    %953 = vadd.xlane.f32.xlu0 %v952
    %v954 = vpop.xlane.xlu0 %953
    %v955 = vmax.f32 %v933, %v945
    %v956 = vmax.f32 %v936, %v948
    %v957 = vmax.f32 %v939, %v951
    %v958 = vmax.f32 %v942, %v954
    %v959 = vmax.f32 %v955, %v956
    %v960 = vmax.f32 %v957, %v958
    %v961 = vmax.f32 %v959, %v960
    %v962 = vsub.f32 %v933, %v961
    %v963 = vsub.f32 %v936, %v961
    %v964 = vsub.f32 %v939, %v961
    %v965 = vsub.f32 %v942, %v961
    %v966 = vsub.f32 %v945, %v961
    %v967 = vsub.f32 %v948, %v961
    %v968 = vsub.f32 %v951, %v961
    %v969 = vsub.f32 %v954, %v961
    %v970 = vmul.f32 %v962, 1.442695
    %v971 = vpow.pop %v970
    %v972 = vmul.f32 %v963, 1.442695
    %v973 = vpow.pop %v972
    %v974 = vmul.f32 %v964, 1.442695
    %v975 = vpow.pop %v974
    %v976 = vmul.f32 %v965, 1.442695
    %v977 = vpow.pop %v976
    %v978 = vmul.f32 %v966, 1.442695
    %v979 = vpow.pop %v978
    %v980 = vmul.f32 %v967, 1.442695
    %v981 = vpow.pop %v980
    %v982 = vmul.f32 %v968, 1.442695
    %v983 = vpow.pop %v982
    %v984 = vmul.f32 %v969, 1.442695
    %v985 = vpow.pop %v984
    %v986 = vadd.f32 %v971, %v973
    %v987 = vadd.f32 %v986, %v975
    %v988 = vadd.f32 %v987, %v977
    %v989 = vadd.f32 %v988, %v979
    %v990 = vadd.f32 %v989, %v981
    %v991 = vadd.f32 %v990, %v983
    %v992 = vadd.f32 %v991, %v985
    %v993 = vrcp.pop %v992
    %v994 = vmul.f32 %v971, %v993
    %v995 = vmul.f32 %v973, %v993
    %v996 = vmul.f32 %v975, %v993
    %v997 = vmul.f32 %v977, %v993
    %v998 = vmul.f32 %v979, %v993
    %v999 = vmul.f32 %v981, %v993
    %v1000 = vmul.f32 %v983, %v993
    %v1001 = vmul.f32 %v985, %v993
    %v1002 = vmul.f32 %v994, %v190
    %v1003 = vmul.f32 %v995, %v276
    %v1004 = vmul.f32 %v996, %v349
    %v1005 = vmul.f32 %v997, %v422
    %v1006 = vmul.f32 %v998, %v495
    %v1007 = vmul.f32 %v999, %v568
    %v1008 = vmul.f32 %v1000, %v641
    %v1009 = vmul.f32 %v1001, %v714
    %vm1010 = vcmask 523520
    %v1011 = vsel %vm1010, %v1002, 0.0
    %v1012 = vsel %vm1010, %v1003, 0.0
    %v1013 = vadd.f32 %v1011, %v1012
    %v1014 = vsel %vm1010, %v1004, 0.0
    %v1015 = vadd.f32 %v1013, %v1014
    %v1016 = vsel %vm1010, %v1005, 0.0
    %v1017 = vadd.f32 %v1015, %v1016
    %v1018 = vsel %vm1010, %v1006, 0.0
    %v1019 = vadd.f32 %v1017, %v1018
    %v1020 = vsel %vm1010, %v1007, 0.0
    %v1021 = vadd.f32 %v1019, %v1020
    %v1022 = vsel %vm1010, %v1008, 0.0
    %v1023 = vadd.f32 %v1021, %v1022
    %v1024 = vsel %vm1010, %v1009, 0.0
    %v1025 = vadd.f32 %v1023, %v1024
    %v1026 = vld [vmem:[%s1] sm:$0xf]
    %v1027 = vld [vmem:[%s7] sm:$0xf]
    %v1028 = vld [vmem:[%s7 + $0x4] sm:$0xf]
    %v1029 = vpack.c.bf16 %v1025, %v1025
    %v1030 = vld [vmem:[%s8] sm:$0xf]
    %v1031 = vld [vmem:[%s8 + $0x4] sm:$0xf]
    %v1032 = vld [vmem:[%s8 + $0x8] sm:$0xf]
    %v1033 = vld [vmem:[%s8 + $0xc] sm:$0xf]
    %1035 = vrot.lane.b32.xlu0 %v1029, 96
    %v1036 = vpop.permute.xlu0 %1035
    %v1041 = vunpack.c.l.b16 %v1030
    %v1042 = vunpack.c.l.b16 %v1031
    %v1043 = vunpack.c.l.b16 %v1032
    %v1044 = vunpack.c.l.b16 %v1033
    %v1045 = vpack.c.b16 %v1042, %v1041
    %v1046 = vpack.c.b16 %v1044, %v1043
    %v1050 = vsel %vm207, %v1036, 0
    %1052 = vmatprep.subr.bf16.mxu0 0
    %1053 = vmatpush1.bf16.msra.mxu0 %v1045
    %1054 = vmatprep.subr.bf16.mxu0 0
    %1055 = vmatpush1.bf16.msra.mxu0 %v1046
    %1056 = vmatprep.subr.bf16.mxu0 0
    %1057 = vmatpush1.bf16.msra.mxu0 0
    %1058 = vmatprep.subr.bf16.mxu0 0
    %1059 = vmatpush1.bf16.msra.mxu0 0
    %1060 = vmatprep.subr.bf16.mxu0 0
    %1061 = vmatpush1.bf16.msra.mxu0 0
    %1062 = vmatprep.subr.bf16.mxu0 0
    %1063 = vmatpush1.bf16.msra.mxu0 0
    %1064 = vmatprep.subr.bf16.mxu0 0
    %1065 = vmatpush1.bf16.msra.mxu0 0
    %1066 = vmatprep.subr.bf16.mxu0 0
    %1067 = vmatpush1.bf16.msra.mxu0 0
    %1068 = vmatprep.subr.bf16.mxu0 0
    %1069 = vmatpush1.bf16.msra.mxu0 0
    %1070 = vmatprep.subr.bf16.mxu0 0
    %1071 = vmatpush1.bf16.msra.mxu0 0
    %1072 = vmatprep.subr.bf16.mxu0 0
    %1073 = vmatpush1.bf16.msra.mxu0 0
    %1074 = vmatprep.subr.bf16.mxu0 0
    %1075 = vmatpush1.bf16.msra.mxu0 0
    %1076 = vmatprep.subr.bf16.mxu0 0
    %1077 = vmatpush1.bf16.msra.mxu0 0
    %1078 = vmatprep.subr.bf16.mxu0 0
    %1079 = vmatpush1.bf16.msra.mxu0 0
    %1080 = vmatprep.subr.bf16.mxu0 0
    %1081 = vmatpush1.bf16.msra.mxu0 0
    %1082 = vmatprep.subr.bf16.mxu0 0
    %1083 = vmatpush1.bf16.msra.mxu0 0
    %1084 = vmatprep.mubr.bf16.mxu0 0
    %1085 = vmatmul.mubr.bf16.gmra.mrb[0].mxu0 %v1050
    %v1086 = vpop.f32.mrb[0].mxu0
    %v1087 = vadd.f32 0.0, %v1086
    %v1088 = vpop.f32.mrb[0].mxu0
    %v1089 = vpop.f32.mrb[0].mxu0
    %v1090 = vpop.f32.mrb[0].mxu0
    %1091 = vdwg.mxu0
    %v1094 = vunpack.c.l.b16 %v1027
    %v1095 = vunpack.c.l.b16 %v1028
    %v1096 = vpack.c.b16 %v1095, %v1094
    %v1099 = vsel %vm81, %v1026, 0
    %1101 = vmatprep.subr.bf16.mxu0 0
    %1102 = vmatpush1.bf16.msra.mxu0 %v1096
    %1103 = vmatprep.subr.bf16.mxu0 0
    %1104 = vmatpush1.bf16.msra.mxu0 0
    %1105 = vmatprep.subr.bf16.mxu0 0
    %1106 = vmatpush1.bf16.msra.mxu0 0
    %1107 = vmatprep.subr.bf16.mxu0 0
    %1108 = vmatpush1.bf16.msra.mxu0 0
    %1109 = vmatprep.subr.bf16.mxu0 0
    %1110 = vmatpush1.bf16.msra.mxu0 0
    %1111 = vmatprep.subr.bf16.mxu0 0
    %1112 = vmatpush1.bf16.msra.mxu0 0
    %1113 = vmatprep.subr.bf16.mxu0 0
    %1114 = vmatpush1.bf16.msra.mxu0 0
    %1115 = vmatprep.subr.bf16.mxu0 0
    %1116 = vmatpush1.bf16.msra.mxu0 0
    %1117 = vmatprep.subr.bf16.mxu0 0
    %1118 = vmatpush1.bf16.msra.mxu0 0
    %1119 = vmatprep.subr.bf16.mxu0 0
    %1120 = vmatpush1.bf16.msra.mxu0 0
    %1121 = vmatprep.subr.bf16.mxu0 0
    %1122 = vmatpush1.bf16.msra.mxu0 0
    %1123 = vmatprep.subr.bf16.mxu0 0
    %1124 = vmatpush1.bf16.msra.mxu0 0
    %1125 = vmatprep.subr.bf16.mxu0 0
    %1126 = vmatpush1.bf16.msra.mxu0 0
    %1127 = vmatprep.subr.bf16.mxu0 0
    %1128 = vmatpush1.bf16.msra.mxu0 0
    %1129 = vmatprep.subr.bf16.mxu0 0
    %1130 = vmatpush1.bf16.msra.mxu0 0
    %1131 = vmatprep.subr.bf16.mxu0 0
    %1132 = vmatpush1.bf16.msra.mxu0 0
    %1133 = vmatprep.mubr.bf16.mxu0 0
    %1134 = vmatmul.mubr.bf16.gmra.mrb[0].mxu0 %v1099
    %v1135 = vpop.f32.mrb[0].mxu0
    %v1136 = vadd.f32 %v1087, %v1135
    %v1137 = vpop.f32.mrb[0].mxu0
    %v1138 = vpop.f32.mrb[0].mxu0
    %v1139 = vpop.f32.mrb[0].mxu0
    %1140 = vdwg.mxu0
    %v1141 = vlaneseq
    %v1142 = vshrl.u32 %v1141, 7
    %v1143 = vsub.s32 2, %v1142
    %v1144 = vrot.slane %v40, %v1143
    %v1145 = vadd.f32 %v1136, %v1144
    %v1146 = vlaneseq
    %v1147 = vshrl.u32 %v1146, 7
    %v1148 = vsub.s32 3, %v1147
    %v1149 = vrot.slane %v40, %v1148
    %v1150 = vadd.f32 %v1145, %v1149
    %v1151 = vxor.u32 %v1150, 2147483648
    %v1152 = vmul.f32 %v1151, 1.442695
    %v1153 = vpow.pop %v1152
    %v1154 = vadd.f32 %v1153, 1.0
    %v1155 = vrcp.pop %v1154
    %v1156 = vmul.f32 1.0, %v1155
    %1158 = vrot.lane.b32.xlu0 %v1149, 64
    %v1159 = vpop.permute.xlu0 %1158
    %v1161 = vmul.f32 %v1156, %v1159
    %1163 = vrot.lane.b32.xlu0 %v1161, 64
    %v1164 = vpop.permute.xlu0 %1163
    %v1166 = vadd.f32 %v1145, %v1164
    %v1167 = vtanh.pop %v1166
    %v1168 = vsub.f32 1.0, %v1156
    %1170 = vrot.lane.b32.xlu0 %v1167, 96
    %v1171 = vpop.permute.xlu0 %1170
    %v1173 = vmul.f32 %v1168, %v1171
    %v1174 = vpack.c.bf16 %v1173, %v1173
    %v1175 = vld [vmem:[%s9] sm:$0xf]
    %v1176 = vld [vmem:[%s9 + $0x4] sm:$0xf]
    %v1177 = vld [vmem:[%s9 + $0x8] sm:$0xf]
    %v1178 = vld [vmem:[%s9 + $0xc] sm:$0xf]
    %v1179 = vlaneseq
    %v1180 = vshrl.u32 %v1179, 7
    %v1181 = vsub.s32 7, %v1180
    %v1182 = vrot.slane %v40, %v1181
    %1184 = vrot.lane.b32.xlu0 %v1174, 96
    %v1185 = vpop.permute.xlu0 %1184
    %v1190 = vunpack.c.l.b16 %v1175
    %v1191 = vunpack.c.l.b16 %v1176
    %v1192 = vunpack.c.l.b16 %v1177
    %v1193 = vunpack.c.l.b16 %v1178
    %v1194 = vpack.c.b16 %v1191, %v1190
    %v1195 = vpack.c.b16 %v1193, %v1192
    %v1199 = vsel %vm207, %v1185, 0
    %1201 = vmatprep.subr.bf16.mxu0 0
    %1202 = vmatpush1.bf16.msra.mxu0 %v1194
    %1203 = vmatprep.subr.bf16.mxu0 0
    %1204 = vmatpush1.bf16.msra.mxu0 %v1195
    %1205 = vmatprep.subr.bf16.mxu0 0
    %1206 = vmatpush1.bf16.msra.mxu0 0
    %1207 = vmatprep.subr.bf16.mxu0 0
    %1208 = vmatpush1.bf16.msra.mxu0 0
    %1209 = vmatprep.subr.bf16.mxu0 0
    %1210 = vmatpush1.bf16.msra.mxu0 0
    %1211 = vmatprep.subr.bf16.mxu0 0
    %1212 = vmatpush1.bf16.msra.mxu0 0
    %1213 = vmatprep.subr.bf16.mxu0 0
    %1214 = vmatpush1.bf16.msra.mxu0 0
    %1215 = vmatprep.subr.bf16.mxu0 0
    %1216 = vmatpush1.bf16.msra.mxu0 0
    %1217 = vmatprep.subr.bf16.mxu0 0
    %1218 = vmatpush1.bf16.msra.mxu0 0
    %1219 = vmatprep.subr.bf16.mxu0 0
    %1220 = vmatpush1.bf16.msra.mxu0 0
    %1221 = vmatprep.subr.bf16.mxu0 0
    %1222 = vmatpush1.bf16.msra.mxu0 0
    %1223 = vmatprep.subr.bf16.mxu0 0
    %1224 = vmatpush1.bf16.msra.mxu0 0
    %1225 = vmatprep.subr.bf16.mxu0 0
    %1226 = vmatpush1.bf16.msra.mxu0 0
    %1227 = vmatprep.subr.bf16.mxu0 0
    %1228 = vmatpush1.bf16.msra.mxu0 0
    %1229 = vmatprep.subr.bf16.mxu0 0
    %1230 = vmatpush1.bf16.msra.mxu0 0
    %1231 = vmatprep.subr.bf16.mxu0 0
    %1232 = vmatpush1.bf16.msra.mxu0 0
    %1233 = vmatprep.mubr.bf16.mxu0 0
    %1234 = vmatmul.mubr.bf16.gmra.mrb[0].mxu0 %v1199
    %v1235 = vpop.f32.mrb[0].mxu0
    %v1236 = vadd.f32 %v1182, %v1235
    %v1237 = vpop.f32.mrb[0].mxu0
    %v1238 = vpop.f32.mrb[0].mxu0
    %v1239 = vpop.f32.mrb[0].mxu0
    %1240 = vdwg.mxu0
    %v1241 = vsel %vm207, %v1236, -inf
    %1242 = vmax.xlane.f32.xlu0 %v1241
    %v1243 = vpop.xlane.xlu0 %1242
    %v1244 = vsub.f32 %v1236, %v1243
    %v1245 = vmul.f32 %v1244, 1.442695
    %v1246 = vpow.pop %v1245
    %v1247 = vsel %vm207, %v1246, 0.0
    %1248 = vadd.xlane.f32.xlu0 %v1247
    %v1249 = vpop.xlane.xlu0 %1248
    %v1250 = vlog2.pop %v1249
    %v1251 = vmul.f32 %v1250, 0.6931472
    %v1252 = vadd.f32 %v1251, %v1243
    %v1253 = vsub.f32 %v1236, %v1252
    %v1254 = vld [vmem:[%s2] sm:$0xff]
    %vm1255 = vcmp.ne.s32.totalorder %v1254, 0
    %v1256 = vsel %vm1255, 1, 0
    %v1257 = vcvt.s32.f32 %v1256
    %vm1258 = vcmask 64512
    %v1259 = vsel %vm1258, %v1257, 0.0
    %v1260 = vrot.slane %v1259, 4
    %v1261 = vadd.f32 %v1259, %v1260
    %v1262 = vrot.slane %v1261, 2
    %v1263 = vadd.f32 %v1261, %v1262
    %v1264 = vrot.slane %v1263, 1
    %v1265 = vadd.f32 %v1263, %v1264
    %v1266 = vlaneseq
    %v1267 = vand.u32 %v1266, 127
    %1268 = vset.pattern.permute.xlu0 1
    %1269 = vperm.xlu0 %1268, %v1254
    %v1270 = vpop.permute.xlu0 %1269
    %vm1271 = vcmp.eq.s32.totalorder %v1267, %v1270
    %1273 = vset.pattern.permute.xlu0 1
    %1274 = vperm.xlu0 %1273, %v1265
    %v1275 = vpop.permute.xlu0 %1274
    %v1277 = vsel %vm1271, %v1275, 0.0
    %v1278 = vadd.f32 %v1277, 0.0
    %1279 = vset.pattern.permute.xlu0 2
    %1280 = vperm.xlu0 %1279, %v1254
    %v1281 = vpop.permute.xlu0 %1280
    %vm1282 = vcmp.eq.s32.totalorder %v1267, %v1281
    %1283 = vset.pattern.permute.xlu0 2
    %1284 = vperm.xlu0 %1283, %v1265
    %v1285 = vpop.permute.xlu0 %1284
    %v1287 = vsel %vm1282, %v1285, 0.0
    %v1288 = vadd.f32 %v1278, %v1287
    %1289 = vset.pattern.permute.xlu0 3
    %1290 = vperm.xlu0 %1289, %v1254
    %v1291 = vpop.permute.xlu0 %1290
    %vm1292 = vcmp.eq.s32.totalorder %v1267, %v1291
    %1293 = vset.pattern.permute.xlu0 3
    %1294 = vperm.xlu0 %1293, %v1265
    %v1295 = vpop.permute.xlu0 %1294
    %v1297 = vsel %vm1292, %v1295, 0.0
    %v1298 = vadd.f32 %v1288, %v1297
    %1299 = vset.pattern.permute.xlu0 4
    %1300 = vperm.xlu0 %1299, %v1254
    %v1301 = vpop.permute.xlu0 %1300
    %vm1302 = vcmp.eq.s32.totalorder %v1267, %v1301
    %1303 = vset.pattern.permute.xlu0 4
    %1304 = vperm.xlu0 %1303, %v1265
    %v1305 = vpop.permute.xlu0 %1304
    %v1307 = vsel %vm1302, %v1305, 0.0
    %v1308 = vadd.f32 %v1298, %v1307
    %1309 = vset.pattern.permute.xlu0 5
    %1310 = vperm.xlu0 %1309, %v1254
    %v1311 = vpop.permute.xlu0 %1310
    %vm1312 = vcmp.eq.s32.totalorder %v1267, %v1311
    %1313 = vset.pattern.permute.xlu0 5
    %1314 = vperm.xlu0 %1313, %v1265
    %v1315 = vpop.permute.xlu0 %1314
    %v1317 = vsel %vm1312, %v1315, 0.0
    %v1318 = vadd.f32 %v1308, %v1317
    %1319 = vset.pattern.permute.xlu0 6
    %1320 = vperm.xlu0 %1319, %v1254
    %v1321 = vpop.permute.xlu0 %1320
    %vm1322 = vcmp.eq.s32.totalorder %v1267, %v1321
    %1323 = vset.pattern.permute.xlu0 6
    %1324 = vperm.xlu0 %1323, %v1265
    %v1325 = vpop.permute.xlu0 %1324
    %v1327 = vsel %vm1322, %v1325, 0.0
    %v1328 = vadd.f32 %v1318, %v1327
    %1329 = vset.pattern.permute.xlu0 7
    %1330 = vperm.xlu0 %1329, %v1254
    %v1331 = vpop.permute.xlu0 %1330
    %vm1332 = vcmp.eq.s32.totalorder %v1267, %v1331
    %1333 = vset.pattern.permute.xlu0 7
    %1334 = vperm.xlu0 %1333, %v1265
    %v1335 = vpop.permute.xlu0 %1334
    %v1337 = vsel %vm1332, %v1335, 0.0
    %v1338 = vadd.f32 %v1328, %v1337
    %v1339 = vlaneseq
    %v1340 = vshrl.u32 %v1339, 7
    %vm1341 = vcmp.lt.s32.totalorder %v1340, 4
    %v1342 = vsel %vm1341, %v1338, 0.0
    %v1343 = vmul.f32 %v1253, %v1342
    %v1344 = vsel %vm207, %v1343, 0.0
    %1345 = vadd.xlane.f32.xlu0 %v1344
    %v1346 = vpop.xlane.xlu0 %1345
    %v1347 = vrot.slane %v1346, 4
    %v1348 = vadd.f32 %v1346, %v1347
    %v1349 = vrot.slane %v1348, 2
    %v1350 = vadd.f32 %v1348, %v1349
    %v1351 = vrot.slane %v1350, 1
    %v1352 = vadd.f32 %v1350, %v1351
    %s1353 = vtos %v1352
    %s1354 = ssub.f32 0.0, %s1353
    %v1355 = vrcp.pop 4.0
    %s1356 = vtos %v1355
    %s1357 = smul.f32 %s1354, %s1356
    %s1358 = scalar_lea.smem [#allocation2], 0
    %1359 = sst [smem:[%s1358]] %s1357
    // Predicated region
    $region46: #{encoder_decoder_loss.1} parent=1 // pred_check
      _
    $region47: #{encoder_decoder_loss.1} parent=1 // pred_check_branch
      %1361 = sbr.rel (0) target = $region49
    $region48: #{encoder_decoder_loss.1} parent=1 // pred_region
      %s1363 = ssub.s32 16, 16
      %1364 = vsyncadd [#allocation3], %s1363
      %1367 = dma.smem_to_hbm [#allocation2], 16, %s11, [#allocation3]
    $region49: #{encoder_decoder_loss.1} parent=1 // pred_fallthru
      _
    // Predicated region
    $region50: #{encoder_decoder_loss.1} parent=1 // pred_check
      _
    $region51: #{encoder_decoder_loss.1} parent=1 // pred_check_branch
      %1369 = sbr.rel (0) target = $region53
    $region52: #{encoder_decoder_loss.1} parent=1 // pred_region
      %1370 = dma.done [#allocation3], 16
    $region53: #{encoder_decoder_loss.1} parent=1 // pred_fallthru
      _
    %1371 = sfence
    %1372 = vsyncpa [#allocation3], 1

</llo_original>
